<compile_context>
chip_gen: v5e
topology: v5e:2x2
jax: 0.10.0
libtpu: 0.0.40
codegen_flags: <defaults>
</compile_context>

<pallas_src>
import functools

import jax
import jax.numpy as jnp
from jax import lax
from jax.experimental import pallas as pl
from jax.experimental.pallas import tpu as pltpu

# rows of the packed (8, D) vector block
_BQ, _BK, _BV, _BO, _GAMMA, _BETA = 0, 1, 2, 3, 4, 5


def decoder_layer_kernel(trg_ref, src_ref, mask_ref,
                         wq_ref, wkv_ref, wo_ref, vec_ref,
                         o_ref,
                         k_scr, v_scr,
                         *, n_heads, inv_scale, eps):
    # trg_ref:  (1, TQ, D) f32     src_ref: (1, Ls, D) f32   mask_ref: (1, 1, Ls)
    # wq_ref:   (D, D)  bf16       wkv_ref: (D, 2D) bf16     wo_ref:  (D, D) bf16
    # vec_ref:  (8, D)  f32   rows: bq, bk, bv, bo, gamma, beta, pad, pad
    # o_ref:    (1, TQ, D) f32
    # k_scr / v_scr: (Ls, D) bf16 persistent VMEM scratch (per-batch K/V cache)
    D = trg_ref.shape[-1]
    Dh = D // n_heads

    vec = vec_ref[...]                                   # (8, D) f32, one vreg

    # ---- K/V projection: computed ONCE per batch element, cached in VMEM ----
    @pl.when(pl.program_id(1) == 0)
    def _():
        s_bf = src_ref[0].astype(jnp.bfloat16)           # (Ls, D)
        kv = jnp.dot(s_bf, wkv_ref[...],
                     preferred_element_type=jnp.float32)  # (Ls, 2D), N=256 MXU
        k_scr[...] = (kv[:, :D] + vec[_BK:_BK + 1, :]).astype(jnp.bfloat16)
        v_scr[...] = (kv[:, D:] + vec[_BV:_BV + 1, :]).astype(jnp.bfloat16)

    t = trg_ref[0]                                       # (TQ, D) f32 (residual)
    t_bf = t.astype(jnp.bfloat16)

    # Q projection (lane-dense N = D), f32 accumulate; fold 1/sqrt(Dh) into Q.
    q = jnp.dot(t_bf, wq_ref[...], preferred_element_type=jnp.float32)
    q = (q + vec[_BQ:_BQ + 1, :]) * inv_scale
    q_bf = q.astype(jnp.bfloat16)

    k = k_scr[...]                                       # (Ls, D) bf16
    v = v_scr[...]                                       # (Ls, D) bf16

    # Additive mask bias, hoisted out of the head loop (single broadcast/select).
    mask_bias = jnp.where(mask_ref[0] > 0, 0.0, -1e10).astype(jnp.float32)

    ctx_heads = []
    for h in range(n_heads):                             # static unrolled (small)
        lo, hi = h * Dh, (h + 1) * Dh
        qh = q_bf[:, lo:hi]                              # (TQ, Dh) bf16
        kh = k[:, lo:hi]                                 # (Ls, Dh) bf16
        vh = v[:, lo:hi]                                 # (Ls, Dh) bf16

        # energy = qh @ kh^T, contracted on the shared feature axis directly
        # (no explicit transpose through the XLU).
        e = lax.dot_general(qh, kh, (((1,), (1,)), ((), ())),
                            preferred_element_type=jnp.float32)   # (TQ, Ls)
        e = e + mask_bias

        # masked softmax over the source axis (f32 elementwise math)
        e = e - jnp.max(e, axis=-1, keepdims=True)
        p = jnp.exp(e)
        denom = jnp.sum(p, axis=-1, keepdims=True)
        p = p * pl.reciprocal(denom, approx=True)        # EUP, not a VALU divide

        ctx_heads.append(jnp.dot(p.astype(jnp.bfloat16), vh,
                                 preferred_element_type=jnp.float32))

    ctx = jnp.concatenate(ctx_heads, axis=-1)            # (TQ, D) f32

    # Output projection, (identity) dropout, residual.
    x = jnp.dot(ctx.astype(jnp.bfloat16), wo_ref[...],
                preferred_element_type=jnp.float32) + vec[_BO:_BO + 1, :]
    # TODO(synk): self.do (dropout) is identity at inference; training-mode
    # dropout would need pltpu.prng_seed / prng_random_bits keep-masks here.
    y = t + x

    # LayerNorm over the feature axis (torch nn.LayerNorm, eps=1e-5), all f32.
    mu = jnp.mean(y, axis=-1, keepdims=True)
    centered = y - mu
    var = jnp.mean(centered * centered, axis=-1, keepdims=True)
    normed = centered * lax.rsqrt(var + eps)
    o_ref[0] = (normed * vec[_GAMMA:_GAMMA + 1, :]
                + vec[_BETA:_BETA + 1, :]).astype(o_ref.dtype)


def decoder_layer_forward(trg, src, src_mask, params, *, n_heads,
                          tq=None, eps=1e-5):
    B, Lt, D = trg.shape
    _, Ls, _ = src.shape
    assert D % n_heads == 0
    Dh = D // n_heads
    if tq is None:
        tq = min(Lt, 256)                 # bigger tile -> fewer grid steps
    assert Lt % tq == 0
    inv_scale = 1.0 / float(Dh) ** 0.5    # scale = sqrt(head_dim)

    # bf16 weights: MXU bf16 rate + half the weight DMA / VMEM bytes.
    wq = params["wq"].astype(jnp.bfloat16)
    wkv = jnp.concatenate([params["wk"], params["wv"]],
                          axis=1).astype(jnp.bfloat16)          # (D, 2D) fused
    wo = params["wo"].astype(jnp.bfloat16)
    # Pack the six (1, D) vectors into one (8, D) f32 block (single DMA stream).
    vecs = jnp.concatenate(
        [params["bq"], params["bk"], params["bv"], params["bo"],
         params["gamma"], params["beta"],
         jnp.zeros((2, D), jnp.float32)], axis=0).astype(jnp.float32)

    kernel = functools.partial(decoder_layer_kernel, n_heads=n_heads,
                               inv_scale=inv_scale, eps=eps)

    def rep(b, qi):                       # grid-invariant (weights / vectors)
        return (0, 0)

    in_specs = [
        pl.BlockSpec((1, tq, D), lambda b, qi: (b, qi, 0)),   # trg query tile
        pl.BlockSpec((1, Ls, D), lambda b, qi: (b, 0, 0)),    # full src per batch
        pl.BlockSpec((1, 1, Ls), lambda b, qi: (b, 0, 0)),    # src padding mask
        pl.BlockSpec((D, D), rep),                            # Wq   (bf16)
        pl.BlockSpec((D, 2 * D), rep),                        # Wk|Wv (bf16)
        pl.BlockSpec((D, D), rep),                            # Wo   (bf16)
        pl.BlockSpec((8, D), rep),                            # packed vectors
    ]
    out_specs = pl.BlockSpec((1, tq, D), lambda b, qi: (b, qi, 0))

    return pl.pallas_call(
        kernel,
        out_shape=jax.ShapeDtypeStruct((B, Lt, D), jnp.float32),
        grid_spec=pltpu.PrefetchScalarGridSpec(
            num_scalar_prefetch=0,
            grid=(B, Lt // tq),
            in_specs=in_specs,
            out_specs=out_specs,
            scratch_shapes=[pltpu.VMEM((Ls, D), jnp.bfloat16),   # K cache
                            pltpu.VMEM((Ls, D), jnp.bfloat16)],  # V cache
        ),
        compiler_params=pltpu.CompilerParams(
            # batch axis parallel (keeps both v7x TensorCores fed); query-tile
            # axis arbitrary so the per-batch K/V scratch caching is valid.
            dimension_semantics=("parallel", "arbitrary")),
    )(trg, src, src_mask, wq, wkv, wo, vecs)


def decoder_layer_reference(trg, src, mask, params, *, n_heads, eps=1e-5):
    """Pure-JAX f32 reference mirroring the torch DecoderLayer forward (eval)."""
    B, Lt, D = trg.shape
    Ls = src.shape[1]
    Dh = D // n_heads
    q = trg @ params["wq"] + params["bq"]
    k = src @ params["wk"] + params["bk"]
    v = src @ params["wv"] + params["bv"]
    qh = q.reshape(B, Lt, n_heads, Dh).transpose(0, 2, 1, 3)
    kh = k.reshape(B, Ls, n_heads, Dh).transpose(0, 2, 1, 3)
    vh = v.reshape(B, Ls, n_heads, Dh).transpose(0, 2, 1, 3)
    energy = jnp.einsum("bhqd,bhkd->bhqk", qh, kh) / (Dh ** 0.5)
    energy = jnp.where(mask[:, :, None, :] > 0, energy, -1e10)
    att = jax.nn.softmax(energy, axis=-1)
    ctx = jnp.einsum("bhqk,bhkd->bhqd", att, vh)
    ctx = ctx.transpose(0, 2, 1, 3).reshape(B, Lt, D)
    x = ctx @ params["wo"] + params["bo"]
    y = trg + x                                   # dropout = identity (eval)
    mu = y.mean(-1, keepdims=True)
    var = ((y - mu) ** 2).mean(-1, keepdims=True)
    return (y - mu) / jnp.sqrt(var + eps) * params["gamma"] + params["beta"]


if __name__ == "__main__":
    B, LT, LS, D, H = 2, 16, 16, 128, 4           # lane-dense hid_dim = 128

    key = jax.random.PRNGKey(0)
    ks = jax.random.split(key, 10)
    w_scale = 1.0 / D ** 0.5
    params = {
        "wq": jax.random.normal(ks[0], (D, D), jnp.float32) * w_scale,
        "bq": jax.random.normal(ks[1], (1, D), jnp.float32) * 0.02,
        "wk": jax.random.normal(ks[2], (D, D), jnp.float32) * w_scale,
        "bk": jax.random.normal(ks[3], (1, D), jnp.float32) * 0.02,
        "wv": jax.random.normal(ks[4], (D, D), jnp.float32) * w_scale,
        "bv": jax.random.normal(ks[5], (1, D), jnp.float32) * 0.02,
        "wo": jax.random.normal(ks[6], (D, D), jnp.float32) * w_scale,
        "bo": jax.random.normal(ks[7], (1, D), jnp.float32) * 0.02,
        "gamma": jnp.ones((1, D), jnp.float32),   # nn.LayerNorm default affine
        "beta": jnp.zeros((1, D), jnp.float32),
    }

    trg = jax.random.normal(ks[8], (B, LT, D), jnp.float32)
    src = jax.random.normal(ks[9], (B, LS, D), jnp.float32)
    # src padding mask (1 = attend, 0 = masked): batch 0 fully visible,
    # batch 1 masks the last 4 source positions.
    src_mask = jnp.ones((B, 1, LS), jnp.float32)
    src_mask = src_mask.at[1, 0, LS - 4:].set(0.0)

    out = decoder_layer_forward(trg, src, src_mask, params, n_heads=H)
    out = jax.block_until_ready(out)

    ref = decoder_layer_reference(trg, src, src_mask, params, n_heads=H)
    assert out.shape == (B, LT, D)
    err = float(jnp.max(jnp.abs(out - ref)))
    # tolerance absorbs bf16 matmul operands (f32 accumulation) and the
    # pl.reciprocal(approx=True) softmax denominator vs. the all-f32 reference
    assert err < 8e-2, f"mismatch vs reference: {err}"

    print("KERNEL_OK")
</pallas_src>

<mosaic_0001>
module attributes {stable_mosaic.version = 11 : i64} {
  func.func @decoder_layer_kernel(%arg0: i32, %arg1: i32, %arg2: memref<1x16x128xf32, #tpu.memory_space<vmem>>, %arg3: memref<1x16x128xf32, #tpu.memory_space<vmem>>, %arg4: memref<1x1x16xf32, #tpu.memory_space<vmem>>, %arg5: memref<128x128xbf16, #tpu.memory_space<vmem>>, %arg6: memref<128x256xbf16, #tpu.memory_space<vmem>>, %arg7: memref<128x128xbf16, #tpu.memory_space<vmem>>, %arg8: memref<8x128xf32, #tpu.memory_space<vmem>>, %arg9: memref<1x16x128xf32, #tpu.memory_space<vmem>>, %arg10: memref<16x128xbf16, #tpu.memory_space<vmem>>, %arg11: memref<16x128xbf16, #tpu.memory_space<vmem>>) attributes {dimension_semantics = [#tpu.dimension_semantics<parallel>, #tpu.dimension_semantics<arbitrary>], iteration_bounds = array<i64: 2, 1>, scalar_prefetch = 0 : i64, scratch_operands = 2 : i64, tpu.core_type = #tpu.core_type<tc>, window_params = [{transform_indices = @transform_0, window_bounds = array<i64: 1, 16, 128>}, {transform_indices = @transform_1, window_bounds = array<i64: 1, 16, 128>}, {transform_indices = @transform_2, window_bounds = array<i64: 1, 1, 16>}, {pipeline_mode = #tpu.pipeline_mode<synchronous>, transform_indices = @transform_3, window_bounds = array<i64: 128, 128>}, {pipeline_mode = #tpu.pipeline_mode<synchronous>, transform_indices = @transform_4, window_bounds = array<i64: 128, 256>}, {pipeline_mode = #tpu.pipeline_mode<synchronous>, transform_indices = @transform_5, window_bounds = array<i64: 128, 128>}, {pipeline_mode = #tpu.pipeline_mode<synchronous>, transform_indices = @transform_6, window_bounds = array<i64: 8, 128>}, {transform_indices = @transform_7, window_bounds = array<i64: 1, 16, 128>}]} {
    %c0 = arith.constant 0 : index
    %c0_0 = arith.constant 0 : index
    %0 = vector.load %arg8[%c0, %c0_0] : memref<8x128xf32, #tpu.memory_space<vmem>>, vector<8x128xf32>
    %c0_i32 = arith.constant 0 : i32
    %1 = arith.cmpi eq, %arg1, %c0_i32 : i32
    %2 = arith.extui %1 : i1 to i32
    %c0_i32_1 = arith.constant 0 : i32
    %3 = arith.cmpi ne, %2, %c0_i32_1 : i32
    scf.if %3 {
      %c0_45 = arith.constant 0 : index
      %c0_46 = arith.constant 0 : index
      %c0_47 = arith.constant 0 : index
      %129 = vector.load %arg3[%c0_45, %c0_46, %c0_47] : memref<1x16x128xf32, #tpu.memory_space<vmem>>, vector<1x16x128xf32>
      %130 = vector.shape_cast %129 : vector<1x16x128xf32> to vector<16x128xf32>
      %131 = arith.truncf %130 : vector<16x128xf32> to vector<16x128xbf16>
      %c0_48 = arith.constant 0 : index
      %c0_49 = arith.constant 0 : index
      %132 = vector.load %arg6[%c0_48, %c0_49] : memref<128x256xbf16, #tpu.memory_space<vmem>>, vector<128x256xbf16>
      %cst_50 = arith.constant dense<0.000000e+00> : vector<16x256xf32>
      %133 = tpu.matmul %131, %132, %cst_50 {dimension_numbers = #tpu.dot_dimension_numbers<[1], [0], [0], [1], [0, 0, 1, 1], [], []>} : vector<16x128xbf16>, vector<128x256xbf16>, vector<16x256xf32> -> vector<16x256xf32>
      %134 = vector.extract_strided_slice %133 {offsets = [0, 0], sizes = [16, 128], strides = [1, 1]} : vector<16x256xf32> to vector<16x128xf32>
      %135 = vector.extract_strided_slice %0 {offsets = [1, 0], sizes = [1, 128], strides = [1, 1]} : vector<8x128xf32> to vector<1x128xf32>
      %136 = vector.broadcast %135 : vector<1x128xf32> to vector<16x128xf32>
      %137 = arith.addf %134, %136 : vector<16x128xf32>
      %138 = arith.truncf %137 : vector<16x128xf32> to vector<16x128xbf16>
      %c0_51 = arith.constant 0 : index
      %c0_52 = arith.constant 0 : index
      %139 = vector.load %arg10[%c0_51, %c0_52] : memref<16x128xbf16, #tpu.memory_space<vmem>>, vector<16x128xbf16>
      tpu.vector_store %arg10[%c0_51, %c0_52], %138 {strides = array<i32>} : memref<16x128xbf16, #tpu.memory_space<vmem>>, vector<16x128xbf16>,
      %140 = vector.extract_strided_slice %133 {offsets = [0, 128], sizes = [16, 128], strides = [1, 1]} : vector<16x256xf32> to vector<16x128xf32>
      %141 = vector.extract_strided_slice %0 {offsets = [2, 0], sizes = [1, 128], strides = [1, 1]} : vector<8x128xf32> to vector<1x128xf32>
      %142 = vector.broadcast %141 : vector<1x128xf32> to vector<16x128xf32>
      %143 = arith.addf %140, %142 : vector<16x128xf32>
      %144 = arith.truncf %143 : vector<16x128xf32> to vector<16x128xbf16>
      %c0_53 = arith.constant 0 : index
      %c0_54 = arith.constant 0 : index
      %145 = vector.load %arg11[%c0_53, %c0_54] : memref<16x128xbf16, #tpu.memory_space<vmem>>, vector<16x128xbf16>
      tpu.vector_store %arg11[%c0_53, %c0_54], %144 {strides = array<i32>} : memref<16x128xbf16, #tpu.memory_space<vmem>>, vector<16x128xbf16>,
    } else {
    }
    %c0_2 = arith.constant 0 : index
    %c0_3 = arith.constant 0 : index
    %c0_4 = arith.constant 0 : index
    %4 = vector.load %arg2[%c0_2, %c0_3, %c0_4] : memref<1x16x128xf32, #tpu.memory_space<vmem>>, vector<1x16x128xf32>
    %5 = vector.shape_cast %4 : vector<1x16x128xf32> to vector<16x128xf32>
    %6 = arith.truncf %5 : vector<16x128xf32> to vector<16x128xbf16>
    %c0_5 = arith.constant 0 : index
    %c0_6 = arith.constant 0 : index
    %7 = vector.load %arg5[%c0_5, %c0_6] : memref<128x128xbf16, #tpu.memory_space<vmem>>, vector<128x128xbf16>
    %cst = arith.constant dense<0.000000e+00> : vector<16x128xf32>
    %8 = tpu.matmul %6, %7, %cst {dimension_numbers = #tpu.dot_dimension_numbers<[1], [0], [0], [1], [0, 0, 1, 1], [], []>} : vector<16x128xbf16>, vector<128x128xbf16>, vector<16x128xf32> -> vector<16x128xf32>
    %9 = vector.extract_strided_slice %0 {offsets = [0, 0], sizes = [1, 128], strides = [1, 1]} : vector<8x128xf32> to vector<1x128xf32>
    %10 = vector.broadcast %9 : vector<1x128xf32> to vector<16x128xf32>
    %11 = arith.addf %8, %10 : vector<16x128xf32>
    %cst_7 = arith.constant 0.176776692 : f32
    %12 = vector.broadcast %cst_7 : f32 to vector<16x128xf32>
    %13 = arith.mulf %11, %12 : vector<16x128xf32>
    %14 = arith.truncf %13 : vector<16x128xf32> to vector<16x128xbf16>
    %c0_8 = arith.constant 0 : index
    %c0_9 = arith.constant 0 : index
    %15 = vector.load %arg10[%c0_8, %c0_9] : memref<16x128xbf16, #tpu.memory_space<vmem>>, vector<16x128xbf16>
    %c0_10 = arith.constant 0 : index
    %c0_11 = arith.constant 0 : index
    %16 = vector.load %arg11[%c0_10, %c0_11] : memref<16x128xbf16, #tpu.memory_space<vmem>>, vector<16x128xbf16>
    %c0_12 = arith.constant 0 : index
    %c0_13 = arith.constant 0 : index
    %c0_14 = arith.constant 0 : index
    %17 = vector.load %arg4[%c0_12, %c0_13, %c0_14] : memref<1x1x16xf32, #tpu.memory_space<vmem>>, vector<1x1x16xf32>
    %18 = vector.shape_cast %17 : vector<1x1x16xf32> to vector<1x16xf32>
    %cst_15 = arith.constant 0.000000e+00 : f32
    %19 = vector.broadcast %cst_15 : f32 to vector<1x16xf32>
    %20 = arith.cmpf ogt, %18, %19 : vector<1x16xf32>
    %cst_16 = arith.constant 0.000000e+00 : f32
    %cst_17 = arith.constant -1.000000e+10 : f32
    %21 = vector.broadcast %cst_16 : f32 to vector<1x16xf32>
    %22 = vector.broadcast %cst_17 : f32 to vector<1x16xf32>
    %23 = arith.select %20, %21, %22 : vector<1x16xi1>, vector<1x16xf32>
    %24 = vector.extract_strided_slice %14 {offsets = [0, 0], sizes = [16, 32], strides = [1, 1]} : vector<16x128xbf16> to vector<16x32xbf16>
    %25 = vector.extract_strided_slice %15 {offsets = [0, 0], sizes = [16, 32], strides = [1, 1]} : vector<16x128xbf16> to vector<16x32xbf16>
    %26 = vector.extract_strided_slice %16 {offsets = [0, 0], sizes = [16, 32], strides = [1, 1]} : vector<16x128xbf16> to vector<16x32xbf16>
    %cst_18 = arith.constant dense<0.000000e+00> : vector<16x16xf32>
    %27 = tpu.matmul %24, %25, %cst_18 {dimension_numbers = #tpu.dot_dimension_numbers<[1], [1], [0], [0], [0, 0, 1, 0], [], []>} : vector<16x32xbf16>, vector<16x32xbf16>, vector<16x16xf32> -> vector<16x16xf32>
    %28 = vector.broadcast %23 : vector<1x16xf32> to vector<16x16xf32>
    %29 = arith.addf %27, %28 : vector<16x16xf32>
    %cst_19 = arith.constant dense<0xFF800000> : vector<16xf32>
    %30 = vector.multi_reduction <maximumf>, %29, %cst_19 [1] : vector<16x16xf32> to vector<16xf32>
    %31 = vector.shape_cast %30 : vector<16xf32> to vector<16x1xf32>
    %32 = vector.broadcast %31 : vector<16x1xf32> to vector<16x16xf32>
    %33 = arith.subf %29, %32 : vector<16x16xf32>
    %34 = math.exp %33 : vector<16x16xf32>
    %cst_20 = arith.constant dense<0.000000e+00> : vector<16xf32>
    %35 = vector.multi_reduction <add>, %34, %cst_20 [1] : vector<16x16xf32> to vector<16xf32>
    %36 = vector.shape_cast %35 : vector<16xf32> to vector<16x1xf32>
    %37 = tpu.reciprocal %36 {approx = true} : vector<16x1xf32> -> vector<16x1xf32>
    %38 = vector.broadcast %37 : vector<16x1xf32> to vector<16x16xf32>
    %39 = arith.mulf %34, %38 : vector<16x16xf32>
    %40 = arith.truncf %39 : vector<16x16xf32> to vector<16x16xbf16>
    %cst_21 = arith.constant dense<0.000000e+00> : vector<16x32xf32>
    %41 = tpu.matmul %40, %26, %cst_21 {dimension_numbers = #tpu.dot_dimension_numbers<[1], [0], [0], [1], [0, 0, 1, 1], [], []>} : vector<16x16xbf16>, vector<16x32xbf16>, vector<16x32xf32> -> vector<16x32xf32>
    %42 = vector.extract_strided_slice %14 {offsets = [0, 32], sizes = [16, 32], strides = [1, 1]} : vector<16x128xbf16> to vector<16x32xbf16>
    %43 = vector.extract_strided_slice %15 {offsets = [0, 32], sizes = [16, 32], strides = [1, 1]} : vector<16x128xbf16> to vector<16x32xbf16>
    %44 = vector.extract_strided_slice %16 {offsets = [0, 32], sizes = [16, 32], strides = [1, 1]} : vector<16x128xbf16> to vector<16x32xbf16>
    %cst_22 = arith.constant dense<0.000000e+00> : vector<16x16xf32>
    %45 = tpu.matmul %42, %43, %cst_22 {dimension_numbers = #tpu.dot_dimension_numbers<[1], [1], [0], [0], [0, 0, 1, 0], [], []>} : vector<16x32xbf16>, vector<16x32xbf16>, vector<16x16xf32> -> vector<16x16xf32>
    %46 = vector.broadcast %23 : vector<1x16xf32> to vector<16x16xf32>
    %47 = arith.addf %45, %46 : vector<16x16xf32>
    %cst_23 = arith.constant dense<0xFF800000> : vector<16xf32>
    %48 = vector.multi_reduction <maximumf>, %47, %cst_23 [1] : vector<16x16xf32> to vector<16xf32>
    %49 = vector.shape_cast %48 : vector<16xf32> to vector<16x1xf32>
    %50 = vector.broadcast %49 : vector<16x1xf32> to vector<16x16xf32>
    %51 = arith.subf %47, %50 : vector<16x16xf32>
    %52 = math.exp %51 : vector<16x16xf32>
    %cst_24 = arith.constant dense<0.000000e+00> : vector<16xf32>
    %53 = vector.multi_reduction <add>, %52, %cst_24 [1] : vector<16x16xf32> to vector<16xf32>
    %54 = vector.shape_cast %53 : vector<16xf32> to vector<16x1xf32>
    %55 = tpu.reciprocal %54 {approx = true} : vector<16x1xf32> -> vector<16x1xf32>
    %56 = vector.broadcast %55 : vector<16x1xf32> to vector<16x16xf32>
    %57 = arith.mulf %52, %56 : vector<16x16xf32>
    %58 = arith.truncf %57 : vector<16x16xf32> to vector<16x16xbf16>
    %cst_25 = arith.constant dense<0.000000e+00> : vector<16x32xf32>
    %59 = tpu.matmul %58, %44, %cst_25 {dimension_numbers = #tpu.dot_dimension_numbers<[1], [0], [0], [1], [0, 0, 1, 1], [], []>} : vector<16x16xbf16>, vector<16x32xbf16>, vector<16x32xf32> -> vector<16x32xf32>
    %60 = vector.extract_strided_slice %14 {offsets = [0, 64], sizes = [16, 32], strides = [1, 1]} : vector<16x128xbf16> to vector<16x32xbf16>
    %61 = vector.extract_strided_slice %15 {offsets = [0, 64], sizes = [16, 32], strides = [1, 1]} : vector<16x128xbf16> to vector<16x32xbf16>
    %62 = vector.extract_strided_slice %16 {offsets = [0, 64], sizes = [16, 32], strides = [1, 1]} : vector<16x128xbf16> to vector<16x32xbf16>
    %cst_26 = arith.constant dense<0.000000e+00> : vector<16x16xf32>
    %63 = tpu.matmul %60, %61, %cst_26 {dimension_numbers = #tpu.dot_dimension_numbers<[1], [1], [0], [0], [0, 0, 1, 0], [], []>} : vector<16x32xbf16>, vector<16x32xbf16>, vector<16x16xf32> -> vector<16x16xf32>
    %64 = vector.broadcast %23 : vector<1x16xf32> to vector<16x16xf32>
    %65 = arith.addf %63, %64 : vector<16x16xf32>
    %cst_27 = arith.constant dense<0xFF800000> : vector<16xf32>
    %66 = vector.multi_reduction <maximumf>, %65, %cst_27 [1] : vector<16x16xf32> to vector<16xf32>
    %67 = vector.shape_cast %66 : vector<16xf32> to vector<16x1xf32>
    %68 = vector.broadcast %67 : vector<16x1xf32> to vector<16x16xf32>
    %69 = arith.subf %65, %68 : vector<16x16xf32>
    %70 = math.exp %69 : vector<16x16xf32>
    %cst_28 = arith.constant dense<0.000000e+00> : vector<16xf32>
    %71 = vector.multi_reduction <add>, %70, %cst_28 [1] : vector<16x16xf32> to vector<16xf32>
    %72 = vector.shape_cast %71 : vector<16xf32> to vector<16x1xf32>
    %73 = tpu.reciprocal %72 {approx = true} : vector<16x1xf32> -> vector<16x1xf32>
    %74 = vector.broadcast %73 : vector<16x1xf32> to vector<16x16xf32>
    %75 = arith.mulf %70, %74 : vector<16x16xf32>
    %76 = arith.truncf %75 : vector<16x16xf32> to vector<16x16xbf16>
    %cst_29 = arith.constant dense<0.000000e+00> : vector<16x32xf32>
    %77 = tpu.matmul %76, %62, %cst_29 {dimension_numbers = #tpu.dot_dimension_numbers<[1], [0], [0], [1], [0, 0, 1, 1], [], []>} : vector<16x16xbf16>, vector<16x32xbf16>, vector<16x32xf32> -> vector<16x32xf32>
    %78 = vector.extract_strided_slice %14 {offsets = [0, 96], sizes = [16, 32], strides = [1, 1]} : vector<16x128xbf16> to vector<16x32xbf16>
    %79 = vector.extract_strided_slice %15 {offsets = [0, 96], sizes = [16, 32], strides = [1, 1]} : vector<16x128xbf16> to vector<16x32xbf16>
    %80 = vector.extract_strided_slice %16 {offsets = [0, 96], sizes = [16, 32], strides = [1, 1]} : vector<16x128xbf16> to vector<16x32xbf16>
    %cst_30 = arith.constant dense<0.000000e+00> : vector<16x16xf32>
    %81 = tpu.matmul %78, %79, %cst_30 {dimension_numbers = #tpu.dot_dimension_numbers<[1], [1], [0], [0], [0, 0, 1, 0], [], []>} : vector<16x32xbf16>, vector<16x32xbf16>, vector<16x16xf32> -> vector<16x16xf32>
    %82 = vector.broadcast %23 : vector<1x16xf32> to vector<16x16xf32>
    %83 = arith.addf %81, %82 : vector<16x16xf32>
    %cst_31 = arith.constant dense<0xFF800000> : vector<16xf32>
    %84 = vector.multi_reduction <maximumf>, %83, %cst_31 [1] : vector<16x16xf32> to vector<16xf32>
    %85 = vector.shape_cast %84 : vector<16xf32> to vector<16x1xf32>
    %86 = vector.broadcast %85 : vector<16x1xf32> to vector<16x16xf32>
    %87 = arith.subf %83, %86 : vector<16x16xf32>
    %88 = math.exp %87 : vector<16x16xf32>
    %cst_32 = arith.constant dense<0.000000e+00> : vector<16xf32>
    %89 = vector.multi_reduction <add>, %88, %cst_32 [1] : vector<16x16xf32> to vector<16xf32>
    %90 = vector.shape_cast %89 : vector<16xf32> to vector<16x1xf32>
    %91 = tpu.reciprocal %90 {approx = true} : vector<16x1xf32> -> vector<16x1xf32>
    %92 = vector.broadcast %91 : vector<16x1xf32> to vector<16x16xf32>
    %93 = arith.mulf %88, %92 : vector<16x16xf32>
    %94 = arith.truncf %93 : vector<16x16xf32> to vector<16x16xbf16>
    %cst_33 = arith.constant dense<0.000000e+00> : vector<16x32xf32>
    %95 = tpu.matmul %94, %80, %cst_33 {dimension_numbers = #tpu.dot_dimension_numbers<[1], [0], [0], [1], [0, 0, 1, 1], [], []>} : vector<16x16xbf16>, vector<16x32xbf16>, vector<16x32xf32> -> vector<16x32xf32>
    %96 = tpu.concatenate %41, %59, %77, %95 in 1 : vector<16x32xf32>, vector<16x32xf32>, vector<16x32xf32>, vector<16x32xf32> -> vector<16x128xf32>
    %97 = arith.truncf %96 : vector<16x128xf32> to vector<16x128xbf16>
    %c0_34 = arith.constant 0 : index
    %c0_35 = arith.constant 0 : index
    %98 = vector.load %arg7[%c0_34, %c0_35] : memref<128x128xbf16, #tpu.memory_space<vmem>>, vector<128x128xbf16>
    %cst_36 = arith.constant dense<0.000000e+00> : vector<16x128xf32>
    %99 = tpu.matmul %97, %98, %cst_36 {dimension_numbers = #tpu.dot_dimension_numbers<[1], [0], [0], [1], [0, 0, 1, 1], [], []>} : vector<16x128xbf16>, vector<128x128xbf16>, vector<16x128xf32> -> vector<16x128xf32>
    %100 = vector.extract_strided_slice %0 {offsets = [3, 0], sizes = [1, 128], strides = [1, 1]} : vector<8x128xf32> to vector<1x128xf32>
    %101 = vector.broadcast %100 : vector<1x128xf32> to vector<16x128xf32>
    %102 = arith.addf %99, %101 : vector<16x128xf32>
    %103 = arith.addf %5, %102 : vector<16x128xf32>
    %cst_37 = arith.constant dense<0.000000e+00> : vector<16xf32>
    %104 = vector.multi_reduction <add>, %103, %cst_37 [1] : vector<16x128xf32> to vector<16xf32>
    %105 = vector.shape_cast %104 : vector<16xf32> to vector<16x1xf32>
    %cst_38 = arith.constant 1.280000e+02 : f32
    %106 = vector.broadcast %cst_38 : f32 to vector<16x1xf32>
    %107 = arith.divf %105, %106 : vector<16x1xf32>
    %108 = vector.broadcast %107 : vector<16x1xf32> to vector<16x128xf32>
    %109 = arith.subf %103, %108 : vector<16x128xf32>
    %110 = arith.mulf %109, %109 : vector<16x128xf32>
    %cst_39 = arith.constant dense<0.000000e+00> : vector<16xf32>
    %111 = vector.multi_reduction <add>, %110, %cst_39 [1] : vector<16x128xf32> to vector<16xf32>
    %112 = vector.shape_cast %111 : vector<16xf32> to vector<16x1xf32>
    %cst_40 = arith.constant 1.280000e+02 : f32
    %113 = vector.broadcast %cst_40 : f32 to vector<16x1xf32>
    %114 = arith.divf %112, %113 : vector<16x1xf32>
    %cst_41 = arith.constant 9.99999974E-6 : f32
    %115 = vector.broadcast %cst_41 : f32 to vector<16x1xf32>
    %116 = arith.addf %114, %115 : vector<16x1xf32>
    %117 = math.rsqrt %116 : vector<16x1xf32>
    %118 = vector.broadcast %117 : vector<16x1xf32> to vector<16x128xf32>
    %119 = arith.mulf %109, %118 : vector<16x128xf32>
    %120 = vector.extract_strided_slice %0 {offsets = [4, 0], sizes = [1, 128], strides = [1, 1]} : vector<8x128xf32> to vector<1x128xf32>
    %121 = vector.broadcast %120 : vector<1x128xf32> to vector<16x128xf32>
    %122 = arith.mulf %119, %121 : vector<16x128xf32>
    %123 = vector.extract_strided_slice %0 {offsets = [5, 0], sizes = [1, 128], strides = [1, 1]} : vector<8x128xf32> to vector<1x128xf32>
    %124 = vector.broadcast %123 : vector<1x128xf32> to vector<16x128xf32>
    %125 = arith.addf %122, %124 : vector<16x128xf32>
    %c0_42 = arith.constant 0 : index
    %c0_43 = arith.constant 0 : index
    %c0_44 = arith.constant 0 : index
    %126 = vector.load %arg9[%c0_42, %c0_43, %c0_44] : memref<1x16x128xf32, #tpu.memory_space<vmem>>, vector<1x16x128xf32>
    %127 = vector.shape_cast %126 : vector<1x16x128xf32> to vector<16x128xf32>
    %128 = vector.shape_cast %125 : vector<16x128xf32> to vector<1x16x128xf32>
    tpu.vector_store %arg9[%c0_42, %c0_43, %c0_44], %128 {strides = array<i32>} : memref<1x16x128xf32, #tpu.memory_space<vmem>>, vector<1x16x128xf32>,
    return
  }
  func.func @transform_0(%arg0: i32, %arg1: i32) -> (i32, i32, i32) {
    %c0_i32 = arith.constant 0 : i32
    %c0_i32_0 = arith.constant 0 : i32
    return %arg0, %arg1, %c0_i32 : i32, i32, i32
  }
  func.func @transform_1(%arg0: i32, %arg1: i32) -> (i32, i32, i32) {
    %c0_i32 = arith.constant 0 : i32
    %c0_i32_0 = arith.constant 0 : i32
    %c0_i32_1 = arith.constant 0 : i32
    return %arg0, %c0_i32, %c0_i32_0 : i32, i32, i32
  }
  func.func @transform_2(%arg0: i32, %arg1: i32) -> (i32, i32, i32) {
    %c0_i32 = arith.constant 0 : i32
    %c0_i32_0 = arith.constant 0 : i32
    %c0_i32_1 = arith.constant 0 : i32
    return %arg0, %c0_i32, %c0_i32_0 : i32, i32, i32
  }
  func.func @transform_3(%arg0: i32, %arg1: i32) -> (i32, i32) {
    %c0_i32 = arith.constant 0 : i32
    %c0_i32_0 = arith.constant 0 : i32
    %c0_i32_1 = arith.constant 0 : i32
    return %c0_i32, %c0_i32_0 : i32, i32
  }
  func.func @transform_4(%arg0: i32, %arg1: i32) -> (i32, i32) {
    %c0_i32 = arith.constant 0 : i32
    %c0_i32_0 = arith.constant 0 : i32
    %c0_i32_1 = arith.constant 0 : i32
    return %c0_i32, %c0_i32_0 : i32, i32
  }
  func.func @transform_5(%arg0: i32, %arg1: i32) -> (i32, i32) {
    %c0_i32 = arith.constant 0 : i32
    %c0_i32_0 = arith.constant 0 : i32
    %c0_i32_1 = arith.constant 0 : i32
    return %c0_i32, %c0_i32_0 : i32, i32
  }
  func.func @transform_6(%arg0: i32, %arg1: i32) -> (i32, i32) {
    %c0_i32 = arith.constant 0 : i32
    %c0_i32_0 = arith.constant 0 : i32
    %c0_i32_1 = arith.constant 0 : i32
    return %c0_i32, %c0_i32_0 : i32, i32
  }
  func.func @transform_7(%arg0: i32, %arg1: i32) -> (i32, i32, i32) {
    %c0_i32 = arith.constant 0 : i32
    %c0_i32_0 = arith.constant 0 : i32
    return %arg0, %arg1, %c0_i32 : i32, i32, i32
  }
}

</mosaic_0001>

<llo_original>
// kernel: tpu_custom_call.1
$region0: #{tpu_custom_call.1}
  #allocation0 [shape = 'u32[]', space=smem, size = 0x4, offset = 0x4, fixed_abs, tag = 'smem constant byte address 0x4 - core index']
  #allocation1 [shape = 'u32[72,128]{1,0:T(1,128)}', space=vmem, size = 0x9000, scoped, tag = 'internal scratch']
  #allocation2 [shape = 'bf16[16,128]{1,0:T(8,128)(2,1)}', space=vmem, size = 0x1000, scoped, tag = 'scratch operand']
  #allocation3 [shape = 'bf16[16,128]{1,0:T(8,128)(2,1)}', space=vmem, size = 0x1000, scoped, tag = 'scratch operand']
  %s0 = inlined_call_operand.hbm [shape: f32[2,16,128], index: 0, kind: input, shape index: {}]
  %s1 = inlined_call_operand.hbm [shape: f32[2,16,128], index: 1, kind: input, shape index: {}]
  %s2 = inlined_call_operand.hbm [shape: f32[2,1,16], index: 2, kind: input, shape index: {}]
  %s3 = inlined_call_operand.hbm [shape: bf16[128,128], index: 3, kind: input, shape index: {}]
  %s4 = inlined_call_operand.hbm [shape: bf16[128,256], index: 4, kind: input, shape index: {}]
  %s5 = inlined_call_operand.hbm [shape: bf16[128,128], index: 5, kind: input, shape index: {}]
  %s6 = inlined_call_operand.hbm [shape: f32[8,128], index: 6, kind: input, shape index: {}]
  %s7 = inlined_call_operand.hbm [shape: f32[2,16,128], index: 7, kind: output, shape index: {}]
  %s8 = sld [smem:[#allocation0]]
  $region93: #{tpu_custom_call.1} parent=0
    _
  %s10 = ssub.s32 1, %s8
  %s11 = scalar_select 0, %s10, %s8
  $region1: #{tpu_custom_call.1} parent=0
    #allocation4 [shape = 'u8[16384]{0}', space=vmem, size = 0x4000, scoped, tag = 'input window, operand 0']
    #allocation5 [shape = 's32[2]{0}', space=sflag, size = 0x8, scoped, tag = 'scoped memory for tpu_custom_call.1']
    #allocation6 [shape = 's32[2]{0}', space=sflag, size = 0x8, scoped, tag = 'scoped memory for tpu_custom_call.1']
    #allocation7 [shape = 'u8[16384]{0}', space=vmem, size = 0x4000, scoped, tag = 'input window, operand 1']
    #allocation8 [shape = 's32[2]{0}', space=sflag, size = 0x8, scoped, tag = 'scoped memory for tpu_custom_call.1']
    #allocation9 [shape = 'u8[1024]{0}', space=vmem, size = 0x400, scoped, tag = 'input window, operand 2']
    #allocation10 [shape = 'u8[32768]{0}', space=vmem, size = 0x8000, scoped, tag = 'input window, operand 3, single buffered']
    #allocation11 [shape = 's32[1]{0}', space=sflag, size = 0x4, scoped, tag = 'scoped memory for tpu_custom_call.1']
    #allocation12 [shape = 'u8[65536]{0}', space=vmem, size = 0x10000, scoped, tag = 'input window, operand 4, single buffered']
    #allocation13 [shape = 'u8[32768]{0}', space=vmem, size = 0x8000, scoped, tag = 'input window, operand 5, single buffered']
    #allocation14 [shape = 's32[1]{0}', space=sflag, size = 0x4, scoped, tag = 'scoped memory for tpu_custom_call.1']
    #allocation15 [shape = 'u8[4096]{0}', space=vmem, size = 0x1000, scoped, tag = 'input window, operand 6, single buffered']
    #allocation16 [shape = 'u8[16384]{0}', space=vmem, size = 0x4000, scoped, tag = 'output window, operand 0']
    %12 = vsyncpa [#allocation5], 0
    %s13 = scalar_lea.sflag [#allocation5], 1
    %14 = vsyncpa %s13, 0
    %15 = vsyncpa [#allocation8], 0
    %s16 = scalar_lea.sflag [#allocation8], 1
    %17 = vsyncpa %s16, 0
    %18 = vsyncpa [#allocation11], 0
    %19 = vsyncpa [#allocation14], 0
    %20 = vsyncpa [#allocation6], 0
    %s21 = scalar_lea.sflag [#allocation6], 1
    %22 = vsyncpa %s21, 0
    loop: start=0, step=1, limit=4
    $region2: #{tpu_custom_call.1} parent=1 // loop_pre_header
      _
    $region3: #{tpu_custom_call.1} parent=1 // loop_header
      %s24 = sphi 0, %s28
      %p25 = scmp.ge.s32.totalorder %s24, 4
      %s31 = sphi 0, %s43
      %s32 = sphi 0, %s39
      %s33 = sphi 0, %s31
      %s34 = sphi 0, %s32
      %s35 = sphi 0, %s33
      %s36 = sphi 0, %s34
      %s48 = sphi 0, %s50
      %s51 = sphi 0, %s48
      %s52 = sphi 0, %s51
      %s68 = sphi 0, %s52
      %s74 = sphi 0, %s76
      %s77 = sphi 0, %s74
      %s78 = sphi 0, %s77
      %s94 = sphi 0, %s78
      %s100 = sphi 0, %s102
      %s103 = sphi 0, %s100
      %s104 = sphi 0, %s103
      %s120 = sphi 0, %s104
      %s124 = sphi 0, %s124
      %s126 = sphi 0, %s124
      %s127 = sphi 0, %s126
      %s141 = sphi 0, %s127
      %s145 = sphi 0, %s145
      %s147 = sphi 0, %s145
      %s148 = sphi 0, %s147
      %s162 = sphi 0, %s148
      %s166 = sphi 0, %s166
      %s168 = sphi 0, %s166
      %s169 = sphi 0, %s168
      %s183 = sphi 0, %s169
      %s187 = sphi 0, %s187
      %s189 = sphi 0, %s187
      %s190 = sphi 0, %s189
      %s204 = sphi 0, %s190
      %s212 = sphi 0, %s214
      %s215 = sphi 0, %s212
      %s216 = sphi 0, %s215
      %s232 = sphi 0, %s216
    $region4: #{tpu_custom_call.1} parent=1 // loop_header_branch
      %27 = sbr.rel (%p25) target = $region8
    $region5: #{tpu_custom_call.1} parent=1 // loop_body
      %s29 = ssub.s32 %s24, 1
      %s30 = ssub.s32 %s24, 2
      %s37 = sadd.s32 1, %s32
      %p38 = scmp.ge.s32.totalorder %s37, 1
      %s39 = scalar_select %p38, 0, %s37
      %s40 = sadd.s32 1, %s31
      %s41 = scalar_select %p38, %s40, %s31
      %p42 = scmp.ge.s32.totalorder %s41, 2
      %s43 = scalar_select %p42, 0, %s41
      %s44 = ssub.s32 %s31, %s43
      %s45 = ssub.s32 %s32, %s39
      %s46 = sor.u32 %s44, %s45
      %p47 = scmp.eq.s32.totalorder %s46, 0
      %s49 = sadd.s32 %s48, 1
      %s50 = scalar_select %p47, %s48, %s49
      %p53 = pneg %p47
      %p54 = scmp.eq.s32.totalorder %s24, 1
      %p55 = por %p53, %p54
      %p56 = scmp.ne.s32.totalorder %s48, %s51
      %p57 = scmp.eq.s32.totalorder %s24, 0
      %p58 = por %p56, %p57
      %p59 = scmp.ne.s32.totalorder %s48, %s51
      %p60 = scmp.eq.s32.totalorder %s29, 1
      %p61 = por %p59, %p60
      %p62 = scmp.ne.s32.totalorder %s51, %s52
      %p63 = scmp.eq.s32.totalorder %s29, 0
      %p64 = por %p62, %p63
      %p65 = scmp.ne.s32.totalorder %s51, %s52
      %p66 = scmp.eq.s32.totalorder %s30, 1
      %p67 = por %p65, %p66
      %p69 = scmp.ne.s32.totalorder %s52, %s68
      %p70 = scmp.eq.s32.totalorder %s30, 0
      %p71 = por %p69, %p70
      %s72 = ssub.s32 %s31, %s43
      %p73 = scmp.eq.s32.totalorder %s72, 0
      %s75 = sadd.s32 %s74, 1
      %s76 = scalar_select %p73, %s74, %s75
      %p79 = pneg %p73
      %p80 = scmp.eq.s32.totalorder %s24, 1
      %p81 = por %p79, %p80
      %p82 = scmp.ne.s32.totalorder %s74, %s77
      %p83 = scmp.eq.s32.totalorder %s24, 0
      %p84 = por %p82, %p83
      %p85 = scmp.ne.s32.totalorder %s74, %s77
      %p86 = scmp.eq.s32.totalorder %s29, 1
      %p87 = por %p85, %p86
      %p88 = scmp.ne.s32.totalorder %s77, %s78
      %p89 = scmp.eq.s32.totalorder %s29, 0
      %p90 = por %p88, %p89
      %p91 = scmp.ne.s32.totalorder %s77, %s78
      %p92 = scmp.eq.s32.totalorder %s30, 1
      %p93 = por %p91, %p92
      %p95 = scmp.ne.s32.totalorder %s78, %s94
      %p96 = scmp.eq.s32.totalorder %s30, 0
      %p97 = por %p95, %p96
      %s98 = ssub.s32 %s31, %s43
      %p99 = scmp.eq.s32.totalorder %s98, 0
      %s101 = sadd.s32 %s100, 1
      %s102 = scalar_select %p99, %s100, %s101
      %p105 = pneg %p99
      %p106 = scmp.eq.s32.totalorder %s24, 1
      %p107 = por %p105, %p106
      %p108 = scmp.ne.s32.totalorder %s100, %s103
      %p109 = scmp.eq.s32.totalorder %s24, 0
      %p110 = por %p108, %p109
      %p111 = scmp.ne.s32.totalorder %s100, %s103
      %p112 = scmp.eq.s32.totalorder %s29, 1
      %p113 = por %p111, %p112
      %p114 = scmp.ne.s32.totalorder %s103, %s104
      %p115 = scmp.eq.s32.totalorder %s29, 0
      %p116 = por %p114, %p115
      %p117 = scmp.ne.s32.totalorder %s103, %s104
      %p118 = scmp.eq.s32.totalorder %s30, 1
      %p119 = por %p117, %p118
      %p121 = scmp.ne.s32.totalorder %s104, %s120
      %p122 = scmp.eq.s32.totalorder %s30, 0
      %p123 = por %p121, %p122
      %s125 = sadd.s32 %s124, 1
      %p128 = scmp.eq.s32.totalorder %s24, 1
      %p129 = scmp.ne.s32.totalorder %s124, %s126
      %p130 = scmp.eq.s32.totalorder %s24, 0
      %p131 = por %p129, %p130
      %p132 = scmp.ne.s32.totalorder %s124, %s126
      %p133 = scmp.eq.s32.totalorder %s29, 1
      %p134 = por %p132, %p133
      %p135 = scmp.ne.s32.totalorder %s126, %s127
      %p136 = scmp.eq.s32.totalorder %s29, 0
      %p137 = por %p135, %p136
      %p138 = scmp.ne.s32.totalorder %s126, %s127
      %p139 = scmp.eq.s32.totalorder %s30, 1
      %p140 = por %p138, %p139
      %p142 = scmp.ne.s32.totalorder %s127, %s141
      %p143 = scmp.eq.s32.totalorder %s30, 0
      %p144 = por %p142, %p143
      %s146 = sadd.s32 %s145, 1
      %p149 = scmp.eq.s32.totalorder %s24, 1
      %p150 = scmp.ne.s32.totalorder %s145, %s147
      %p151 = scmp.eq.s32.totalorder %s24, 0
      %p152 = por %p150, %p151
      %p153 = scmp.ne.s32.totalorder %s145, %s147
      %p154 = scmp.eq.s32.totalorder %s29, 1
      %p155 = por %p153, %p154
      %p156 = scmp.ne.s32.totalorder %s147, %s148
      %p157 = scmp.eq.s32.totalorder %s29, 0
      %p158 = por %p156, %p157
      %p159 = scmp.ne.s32.totalorder %s147, %s148
      %p160 = scmp.eq.s32.totalorder %s30, 1
      %p161 = por %p159, %p160
      %p163 = scmp.ne.s32.totalorder %s148, %s162
      %p164 = scmp.eq.s32.totalorder %s30, 0
      %p165 = por %p163, %p164
      %s167 = sadd.s32 %s166, 1
      %p170 = scmp.eq.s32.totalorder %s24, 1
      %p171 = scmp.ne.s32.totalorder %s166, %s168
      %p172 = scmp.eq.s32.totalorder %s24, 0
      %p173 = por %p171, %p172
      %p174 = scmp.ne.s32.totalorder %s166, %s168
      %p175 = scmp.eq.s32.totalorder %s29, 1
      %p176 = por %p174, %p175
      %p177 = scmp.ne.s32.totalorder %s168, %s169
      %p178 = scmp.eq.s32.totalorder %s29, 0
      %p179 = por %p177, %p178
      %p180 = scmp.ne.s32.totalorder %s168, %s169
      %p181 = scmp.eq.s32.totalorder %s30, 1
      %p182 = por %p180, %p181
      %p184 = scmp.ne.s32.totalorder %s169, %s183
      %p185 = scmp.eq.s32.totalorder %s30, 0
      %p186 = por %p184, %p185
      %s188 = sadd.s32 %s187, 1
      %p191 = scmp.eq.s32.totalorder %s24, 1
      %p192 = scmp.ne.s32.totalorder %s187, %s189
      %p193 = scmp.eq.s32.totalorder %s24, 0
      %p194 = por %p192, %p193
      %p195 = scmp.ne.s32.totalorder %s187, %s189
      %p196 = scmp.eq.s32.totalorder %s29, 1
      %p197 = por %p195, %p196
      %p198 = scmp.ne.s32.totalorder %s189, %s190
      %p199 = scmp.eq.s32.totalorder %s29, 0
      %p200 = por %p198, %p199
      %p201 = scmp.ne.s32.totalorder %s189, %s190
      %p202 = scmp.eq.s32.totalorder %s30, 1
      %p203 = por %p201, %p202
      %p205 = scmp.ne.s32.totalorder %s190, %s204
      %p206 = scmp.eq.s32.totalorder %s30, 0
      %p207 = por %p205, %p206
      %s208 = ssub.s32 %s31, %s43
      %s209 = ssub.s32 %s32, %s39
      %s210 = sor.u32 %s208, %s209
      %p211 = scmp.eq.s32.totalorder %s210, 0
      %s213 = sadd.s32 %s212, 1
      %s214 = scalar_select %p211, %s212, %s213
      %p217 = pneg %p211
      %p218 = scmp.eq.s32.totalorder %s24, 1
      %p219 = por %p217, %p218
      %p220 = scmp.ne.s32.totalorder %s212, %s215
      %p221 = scmp.eq.s32.totalorder %s24, 0
      %p222 = por %p220, %p221
      %p223 = scmp.ne.s32.totalorder %s212, %s215
      %p224 = scmp.eq.s32.totalorder %s29, 1
      %p225 = por %p223, %p224
      %p226 = scmp.ne.s32.totalorder %s215, %s216
      %p227 = scmp.eq.s32.totalorder %s29, 0
      %p228 = por %p226, %p227
      %p229 = scmp.ne.s32.totalorder %s215, %s216
      %p230 = scmp.eq.s32.totalorder %s30, 1
      %p231 = por %p229, %p230
      %p233 = scmp.ne.s32.totalorder %s216, %s232
      %p234 = scmp.eq.s32.totalorder %s30, 0
      %p235 = por %p233, %p234
      %p236 = scmp.le.s32.totalorder 1, %s24
      %p237 = scmp.lt.s32.totalorder %s24, 3
      %p238 = pnand %p236, %p237
      %p239 = pneg %p238
      // Predicated region
      $region9: #{tpu_custom_call.1} parent=5 // pred_check
        _
      $region10: #{tpu_custom_call.1} parent=5 // pred_check_branch
        %241 = sbr.rel (%p238) target = $region12
      $region11: #{tpu_custom_call.1} parent=5 // pred_region
        %s242 = ssub.s32 %s24, 1
        // Predicated region
        $region13: #{tpu_custom_call.1} parent=11 // pred_check
          %p243 = pneg %p137
        $region14: #{tpu_custom_call.1} parent=11 // pred_check_branch
          %245 = sbr.rel (%p243) target = $region16
        $region15: #{tpu_custom_call.1} parent=11 // pred_region
          %247 = vsyncadd [#allocation11], 0
          %s248 = sshll.u32 %s3, 4
          %s249 = int_to_ptr.hbm [resolvable:$true] %s248
          %s250 = sshll.u32 [#allocation10], 4
          %s251 = int_to_ptr.vmem [resolvable:$true] %s250
          %256 = dma.hbm_to_vmem [thread:$0]  %s249, 1024, %s251, [#allocation11], 64, 64, 4
        $region16: #{tpu_custom_call.1} parent=11 // pred_fallthru
          _
        // Predicated region
        $region17: #{tpu_custom_call.1} parent=11 // pred_check
          %p257 = pneg %p158
        $region18: #{tpu_custom_call.1} parent=11 // pred_check_branch
          %259 = sbr.rel (%p257) target = $region20
        $region19: #{tpu_custom_call.1} parent=11 // pred_region
          %261 = vsyncadd [#allocation11], 0
          %s262 = sshll.u32 %s4, 4
          %s263 = int_to_ptr.hbm [resolvable:$true] %s262
          %s264 = sshll.u32 [#allocation12], 4
          %s265 = int_to_ptr.vmem [resolvable:$true] %s264
          %270 = dma.hbm_to_vmem [thread:$0]  %s263, 2048, %s265, [#allocation11], 128, 128, 8
        $region20: #{tpu_custom_call.1} parent=11 // pred_fallthru
          _
        // Predicated region
        $region21: #{tpu_custom_call.1} parent=11 // pred_check
          %p271 = pneg %p179
        $region22: #{tpu_custom_call.1} parent=11 // pred_check_branch
          %273 = sbr.rel (%p271) target = $region24
        $region23: #{tpu_custom_call.1} parent=11 // pred_region
          %275 = vsyncadd [#allocation14], 0
          %s276 = sshll.u32 %s5, 4
          %s277 = int_to_ptr.hbm [resolvable:$true] %s276
          %s278 = sshll.u32 [#allocation13], 4
          %s279 = int_to_ptr.vmem [resolvable:$true] %s278
          %284 = dma.hbm_to_vmem [thread:$0]  %s277, 1024, %s279, [#allocation14], 64, 64, 4
        $region24: #{tpu_custom_call.1} parent=11 // pred_fallthru
          _
        // Predicated region
        $region25: #{tpu_custom_call.1} parent=11 // pred_check
          %p285 = pneg %p200
        $region26: #{tpu_custom_call.1} parent=11 // pred_check_branch
          %287 = sbr.rel (%p285) target = $region28
        $region27: #{tpu_custom_call.1} parent=11 // pred_region
          %289 = vsyncadd [#allocation14], 0
          %s291 = sshll.u32 %s6, 4
          %s292 = int_to_ptr.hbm [resolvable:$true] %s291
          %s293 = sshll.u32 [#allocation15], 4
          %s294 = int_to_ptr.vmem [resolvable:$true] %s293
          %296 = dma.hbm_to_vmem [thread:$0]  %s292, 128, %s294, [#allocation14]
        $region28: #{tpu_custom_call.1} parent=11 // pred_fallthru
          _
      $region12: #{tpu_custom_call.1} parent=5 // pred_fallthru
        _
      %p297 = scmp.lt.s32.totalorder %s24, 2
      // Predicated region
      $region29: #{tpu_custom_call.1} parent=5 // pred_check
        %p298 = pneg %p297
      $region30: #{tpu_custom_call.1} parent=5 // pred_check_branch
        %300 = sbr.rel (%p298) target = $region32
      $region31: #{tpu_custom_call.1} parent=5 // pred_region
        // Predicated region
        $region33: #{tpu_custom_call.1} parent=31 // pred_check
          %p301 = pneg %p58
        $region34: #{tpu_custom_call.1} parent=31 // pred_check_branch
          %303 = sbr.rel (%p301) target = $region36
        $region35: #{tpu_custom_call.1} parent=31 // pred_region
          %s304 = sand.u32 %s48, 1
          %s305 = scalar_lea.sflag [#allocation5], %s304
          %s306 = sand.u32 %s48, 1
          %s307 = smul.addr %s306, 16
          %s308 = scalar_lea.vmem [#allocation4], %s307
          %s309 = smul.u32 2, %s32
          %311 = vsyncadd %s305, 0
          %s312 = smul.addr %s31, 2
          %s313 = sadd.s32 %s309, %s312
          %s314 = smul.addr %s313, 8
          %s315 = scalar_lea.hbm %s0, %s314
          %s316 = sshll.u32 %s315, 4
          %s317 = int_to_ptr.hbm [resolvable:$true] %s316
          %s318 = sshll.u32 %s308, 4
          %s319 = int_to_ptr.vmem [resolvable:$true] %s318
          %324 = dma.hbm_to_vmem [thread:$0]  %s317, 256, %s319, %s305, 128, 128, 8
        $region36: #{tpu_custom_call.1} parent=31 // pred_fallthru
          _
        // Predicated region
        $region37: #{tpu_custom_call.1} parent=31 // pred_check
          %p325 = pneg %p84
        $region38: #{tpu_custom_call.1} parent=31 // pred_check_branch
          %327 = sbr.rel (%p325) target = $region40
        $region39: #{tpu_custom_call.1} parent=31 // pred_region
          %s328 = sand.u32 %s24, 1
          %s329 = scalar_lea.sflag [#allocation8], %s328
          %s330 = sand.u32 %s74, 1
          %s331 = smul.addr %s330, 16
          %s332 = scalar_lea.vmem [#allocation7], %s331
          %334 = vsyncadd %s329, 0
          %s335 = smul.addr %s31, 2
          %s336 = smul.addr %s335, 8
          %s337 = scalar_lea.hbm %s1, %s336
          %s338 = sshll.u32 %s337, 4
          %s339 = int_to_ptr.hbm [resolvable:$true] %s338
          %s340 = sshll.u32 %s332, 4
          %s341 = int_to_ptr.vmem [resolvable:$true] %s340
          %346 = dma.hbm_to_vmem [thread:$0]  %s339, 256, %s341, %s329, 128, 128, 8
        $region40: #{tpu_custom_call.1} parent=31 // pred_fallthru
          _
        // Predicated region
        $region41: #{tpu_custom_call.1} parent=31 // pred_check
          %p347 = pneg %p110
        $region42: #{tpu_custom_call.1} parent=31 // pred_check_branch
          %349 = sbr.rel (%p347) target = $region44
        $region43: #{tpu_custom_call.1} parent=31 // pred_region
          %s350 = sand.u32 %s24, 1
          %s351 = scalar_lea.sflag [#allocation8], %s350
          %s352 = sand.u32 %s100, 1
          %s353 = scalar_lea.vmem [#allocation9], %s352
          %355 = vsyncadd %s351, 0
          %s356 = scalar_lea.hbm %s2, %s31
          %s358 = sshll.u32 %s356, 4
          %s359 = int_to_ptr.hbm [resolvable:$true] %s358
          %s360 = sshll.u32 %s353, 4
          %s361 = int_to_ptr.vmem [resolvable:$true] %s360
          %363 = dma.hbm_to_vmem [thread:$0]  %s359, 16, %s361, %s351
        $region44: #{tpu_custom_call.1} parent=31 // pred_fallthru
          _
      $region32: #{tpu_custom_call.1} parent=5 // pred_fallthru
        _
      %p364 = scmp.le.s32.totalorder 1, %s24
      %p365 = scmp.lt.s32.totalorder %s24, 3
      %p366 = pnand %p364, %p365
      %p367 = pneg %p366
      // Predicated region
      $region45: #{tpu_custom_call.1} parent=5 // pred_check
        _
      $region46: #{tpu_custom_call.1} parent=5 // pred_check_branch
        %369 = sbr.rel (%p366) target = $region48
      $region47: #{tpu_custom_call.1} parent=5 // pred_region
        %s370 = ssub.s32 %s24, 1
        %s371 = sand.u32 %s51, 1
        %s372 = scalar_lea.sflag [#allocation5], %s371
        %s373 = sand.u32 %s51, 1
        %s374 = smul.addr %s373, 16
        %s375 = scalar_lea.vmem [#allocation4], %s374
        // Predicated region
        $region49: #{tpu_custom_call.1} parent=47 // pred_check
          %p376 = pneg %p64
        $region50: #{tpu_custom_call.1} parent=47 // pred_check_branch
          %378 = sbr.rel (%p376) target = $region52
        $region51: #{tpu_custom_call.1} parent=47 // pred_region
          %380 = dma.done %s372, 256
        $region52: #{tpu_custom_call.1} parent=47 // pred_fallthru
          _
        %s381 = sand.u32 %s29, 1
        %s382 = scalar_lea.sflag [#allocation8], %s381
        %s383 = sand.u32 %s77, 1
        %s384 = smul.addr %s383, 16
        %s385 = scalar_lea.vmem [#allocation7], %s384
        // Predicated region
        $region53: #{tpu_custom_call.1} parent=47 // pred_check
          %p386 = pneg %p90
        $region54: #{tpu_custom_call.1} parent=47 // pred_check_branch
          %388 = sbr.rel (%p386) target = $region56
        $region55: #{tpu_custom_call.1} parent=47 // pred_region
          %390 = dma.done %s382, 256
        $region56: #{tpu_custom_call.1} parent=47 // pred_fallthru
          _
        %s391 = sand.u32 %s29, 1
        %s392 = scalar_lea.sflag [#allocation8], %s391
        %s393 = sand.u32 %s103, 1
        %s394 = scalar_lea.vmem [#allocation9], %s393
        // Predicated region
        $region57: #{tpu_custom_call.1} parent=47 // pred_check
          %p395 = pneg %p116
        $region58: #{tpu_custom_call.1} parent=47 // pred_check_branch
          %397 = sbr.rel (%p395) target = $region60
        $region59: #{tpu_custom_call.1} parent=47 // pred_region
          %399 = dma.done %s392, 16
        $region60: #{tpu_custom_call.1} parent=47 // pred_fallthru
          _
        // Predicated region
        $region61: #{tpu_custom_call.1} parent=47 // pred_check
          %p400 = pneg %p137
        $region62: #{tpu_custom_call.1} parent=47 // pred_check_branch
          %402 = sbr.rel (%p400) target = $region64
        $region63: #{tpu_custom_call.1} parent=47 // pred_region
          %404 = dma.done [#allocation11], 1024
        $region64: #{tpu_custom_call.1} parent=47 // pred_fallthru
          _
        // Predicated region
        $region65: #{tpu_custom_call.1} parent=47 // pred_check
          %p405 = pneg %p158
        $region66: #{tpu_custom_call.1} parent=47 // pred_check_branch
          %407 = sbr.rel (%p405) target = $region68
        $region67: #{tpu_custom_call.1} parent=47 // pred_region
          %409 = dma.done [#allocation11], 2048
        $region68: #{tpu_custom_call.1} parent=47 // pred_fallthru
          _
        // Predicated region
        $region69: #{tpu_custom_call.1} parent=47 // pred_check
          %p410 = pneg %p179
        $region70: #{tpu_custom_call.1} parent=47 // pred_check_branch
          %412 = sbr.rel (%p410) target = $region72
        $region71: #{tpu_custom_call.1} parent=47 // pred_region
          %414 = dma.done [#allocation14], 1024
        $region72: #{tpu_custom_call.1} parent=47 // pred_fallthru
          _
        // Predicated region
        $region73: #{tpu_custom_call.1} parent=47 // pred_check
          %p415 = pneg %p200
        $region74: #{tpu_custom_call.1} parent=47 // pred_check_branch
          %417 = sbr.rel (%p415) target = $region76
        $region75: #{tpu_custom_call.1} parent=47 // pred_region
          %419 = dma.done [#allocation14], 128
        $region76: #{tpu_custom_call.1} parent=47 // pred_fallthru
          _
        %s420 = sand.u32 %s51, 1
        %s421 = scalar_lea.sflag [#allocation5], %s420
        %s422 = sand.u32 %s51, 1
        %s423 = smul.addr %s422, 16
        %s424 = scalar_lea.vmem [#allocation4], %s423
        %p425 = pneg %p64
        %p426 = pneg %p61
        %s427 = sand.u32 %s29, 1
        %s428 = scalar_lea.sflag [#allocation8], %s427
        %s429 = sand.u32 %s77, 1
        %s430 = smul.addr %s429, 16
        %s431 = scalar_lea.vmem [#allocation7], %s430
        %p432 = pneg %p90
        %p433 = pneg %p87
        %s434 = sand.u32 %s29, 1
        %s435 = scalar_lea.sflag [#allocation8], %s434
        %s436 = sand.u32 %s103, 1
        %s437 = scalar_lea.vmem [#allocation9], %s436
        %p438 = pneg %p116
        %p439 = pneg %p113
        %p440 = pneg %p137
        %p441 = pneg %p134
        %p442 = pneg %p158
        %p443 = pneg %p155
        %p444 = pneg %p179
        %p445 = pneg %p176
        %p446 = pneg %p200
        %p447 = pneg %p197
        %p448 = pneg %p228
        %p449 = pneg %p225
        %s450 = sand.u32 %s215, 1
        %s451 = scalar_lea.sflag [#allocation6], %s450
        %s452 = sand.u32 %s215, 1
        %s453 = smul.addr %s452, 16
        %s454 = scalar_lea.vmem [#allocation16], %s453
        %s455 = smul.u32 2, %s34
        %s456 = smul.u32 2, %s34
        %v458 = vld [vmem:[#allocation15] sm:$0xff]
        %p459 = scmp.eq.s32.totalorder %s34, 0
        // Predicated region
        $region77: #{tpu_custom_call.1} parent=47 // pred_check
          %p460 = pneg %p459
        $region78: #{tpu_custom_call.1} parent=47 // pred_check_branch
          %462 = sbr.rel (%p460) target = $region80
        $region79: #{tpu_custom_call.1} parent=47 // pred_region
          %v463 = vld [vmem:[%s385] sm:$0xff]
          %v464 = vld [vmem:[%s385 + $0x8] sm:$0xff]
          %v465 = vpack.c.bf16 %v464, %v463
          %v466 = vld [vmem:[#allocation12] sm:$0xff]
          %v467 = vld [vmem:[#allocation12 + $0x8] sm:$0xff]
          %v468 = vld [vmem:[#allocation12 + $0x10] sm:$0xff]
          %v469 = vld [vmem:[#allocation12 + $0x18] sm:$0xff]
          %v470 = vld [vmem:[#allocation12 + $0x20] sm:$0xff]
          %v471 = vld [vmem:[#allocation12 + $0x28] sm:$0xff]
          %v472 = vld [vmem:[#allocation12 + $0x30] sm:$0xff]
          %v473 = vld [vmem:[#allocation12 + $0x38] sm:$0xff]
          %v474 = vld [vmem:[#allocation12 + $0x40] sm:$0xff]
          %v475 = vld [vmem:[#allocation12 + $0x48] sm:$0xff]
          %v476 = vld [vmem:[#allocation12 + $0x50] sm:$0xff]
          %v477 = vld [vmem:[#allocation12 + $0x58] sm:$0xff]
          %v478 = vld [vmem:[#allocation12 + $0x60] sm:$0xff]
          %v479 = vld [vmem:[#allocation12 + $0x68] sm:$0xff]
          %v480 = vld [vmem:[#allocation12 + $0x70] sm:$0xff]
          %v481 = vld [vmem:[#allocation12 + $0x78] sm:$0xff]
          %v498 = vunpack.c.l.b16 %v466
          %v499 = vunpack.c.h.b16 %v466
          %v500 = vunpack.c.l.b16 %v467
          %v501 = vunpack.c.h.b16 %v467
          %v502 = vunpack.c.l.b16 %v468
          %v503 = vunpack.c.h.b16 %v468
          %v504 = vunpack.c.l.b16 %v469
          %v505 = vunpack.c.h.b16 %v469
          %v506 = vunpack.c.l.b16 %v470
          %v507 = vunpack.c.h.b16 %v470
          %v508 = vunpack.c.l.b16 %v471
          %v509 = vunpack.c.h.b16 %v471
          %v510 = vunpack.c.l.b16 %v472
          %v511 = vunpack.c.h.b16 %v472
          %v512 = vunpack.c.l.b16 %v473
          %v513 = vunpack.c.h.b16 %v473
          %v514 = vunpack.c.l.b16 %v474
          %v515 = vunpack.c.h.b16 %v474
          %v516 = vunpack.c.l.b16 %v475
          %v517 = vunpack.c.h.b16 %v475
          %v518 = vunpack.c.l.b16 %v476
          %v519 = vunpack.c.h.b16 %v476
          %v520 = vunpack.c.l.b16 %v477
          %v521 = vunpack.c.h.b16 %v477
          %v522 = vunpack.c.l.b16 %v478
          %v523 = vunpack.c.h.b16 %v478
          %v524 = vunpack.c.l.b16 %v479
          %v525 = vunpack.c.h.b16 %v479
          %v526 = vunpack.c.l.b16 %v480
          %v527 = vunpack.c.h.b16 %v480
          %v528 = vunpack.c.l.b16 %v481
          %v529 = vunpack.c.h.b16 %v481
          %v530 = vpack.c.b16 %v500, %v498
          %v531 = vpack.c.b16 %v501, %v499
          %v532 = vpack.c.b16 %v504, %v502
          %v533 = vpack.c.b16 %v505, %v503
          %v534 = vpack.c.b16 %v508, %v506
          %v535 = vpack.c.b16 %v509, %v507
          %v536 = vpack.c.b16 %v512, %v510
          %v537 = vpack.c.b16 %v513, %v511
          %v538 = vpack.c.b16 %v516, %v514
          %v539 = vpack.c.b16 %v517, %v515
          %v540 = vpack.c.b16 %v520, %v518
          %v541 = vpack.c.b16 %v521, %v519
          %v542 = vpack.c.b16 %v524, %v522
          %v543 = vpack.c.b16 %v525, %v523
          %v544 = vpack.c.b16 %v528, %v526
          %v545 = vpack.c.b16 %v529, %v527
          %562 = vmatpush.bf16.msra.mxu0 %v544
          %563 = vmatpush.bf16.msra.mxu0 %v542
          %564 = vmatpush.bf16.msra.mxu0 %v540
          %565 = vmatpush.bf16.msra.mxu0 %v538
          %566 = vmatpush.bf16.msra.mxu0 %v536
          %567 = vmatpush.bf16.msra.mxu0 %v534
          %568 = vmatpush.bf16.msra.mxu0 %v532
          %569 = vmatpush.bf16.msra.mxu0 %v530
          %570 = vmatmul.bf16.gmra.mxu0 %v465
          %v571 = vpop.f32.mrf.mxu0
          %v572 = vadd.f32 0.0, %v571
          %v573 = vpop.f32.mrf.mxu0
          %v574 = vadd.f32 0.0, %v573
          %575 = vdwg.mxu0
          %576 = vmatpush.bf16.msra.mxu0 %v545
          %577 = vmatpush.bf16.msra.mxu0 %v543
          %578 = vmatpush.bf16.msra.mxu0 %v541
          %579 = vmatpush.bf16.msra.mxu0 %v539
          %580 = vmatpush.bf16.msra.mxu0 %v537
          %581 = vmatpush.bf16.msra.mxu0 %v535
          %582 = vmatpush.bf16.msra.mxu0 %v533
          %583 = vmatpush.bf16.msra.mxu0 %v531
          %584 = vmatmul.bf16.gmra.mxu0 %v465
          %v585 = vpop.f32.mrf.mxu0
          %v586 = vadd.f32 0.0, %v585
          %v587 = vpop.f32.mrf.mxu0
          %v588 = vadd.f32 0.0, %v587
          %589 = vdwg.mxu0
          %v590 = vperm.slane %v458, 1
          %v591 = vadd.f32 %v572, %v590
          %v592 = vadd.f32 %v574, %v590
          %v593 = vpack.c.bf16 %v591, %v591
          %v594 = vpack.c.bf16 %v592, %v592
          %595 = vst [vmem:[#allocation2] sm:$0xf] %v593
          %596 = vst [vmem:[#allocation2 + $0x4] sm:$0xf] %v594
          %v597 = vperm.slane %v458, 2
          %v598 = vadd.f32 %v586, %v597
          %v599 = vadd.f32 %v588, %v597
          %v600 = vpack.c.bf16 %v598, %v598
          %v601 = vpack.c.bf16 %v599, %v599
          %602 = vst [vmem:[#allocation3] sm:$0xf] %v600
          %603 = vst [vmem:[#allocation3 + $0x4] sm:$0xf] %v601
        $region80: #{tpu_custom_call.1} parent=47 // pred_fallthru
          _
        %v604 = vld [vmem:[%s375] sm:$0xff]
        %v605 = vld [vmem:[%s375 + $0x8] sm:$0xff]
        %v606 = vpack.c.bf16 %v605, %v604
        %v607 = vld [vmem:[#allocation10] sm:$0xf]
        %v608 = vld [vmem:[#allocation10 + $0x4] sm:$0xf]
        %v609 = vld [vmem:[#allocation10 + $0x8] sm:$0xf]
        %v610 = vld [vmem:[#allocation10 + $0xc] sm:$0xf]
        %v611 = vld [vmem:[#allocation10 + $0x10] sm:$0xf]
        %v612 = vld [vmem:[#allocation10 + $0x14] sm:$0xf]
        %v613 = vld [vmem:[#allocation10 + $0x18] sm:$0xf]
        %v614 = vld [vmem:[#allocation10 + $0x1c] sm:$0xf]
        %v615 = vld [vmem:[#allocation10 + $0x20] sm:$0xf]
        %v616 = vld [vmem:[#allocation10 + $0x24] sm:$0xf]
        %v617 = vld [vmem:[#allocation10 + $0x28] sm:$0xf]
        %v618 = vld [vmem:[#allocation10 + $0x2c] sm:$0xf]
        %v619 = vld [vmem:[#allocation10 + $0x30] sm:$0xf]
        %v620 = vld [vmem:[#allocation10 + $0x34] sm:$0xf]
        %v621 = vld [vmem:[#allocation10 + $0x38] sm:$0xf]
        %v622 = vld [vmem:[#allocation10 + $0x3c] sm:$0xf]
        %v623 = vperm.slane %v458, 0
        %v640 = vunpack.c.l.b16 %v607
        %v641 = vunpack.c.l.b16 %v608
        %v642 = vunpack.c.l.b16 %v609
        %v643 = vunpack.c.l.b16 %v610
        %v644 = vunpack.c.l.b16 %v611
        %v645 = vunpack.c.l.b16 %v612
        %v646 = vunpack.c.l.b16 %v613
        %v647 = vunpack.c.l.b16 %v614
        %v648 = vunpack.c.l.b16 %v615
        %v649 = vunpack.c.l.b16 %v616
        %v650 = vunpack.c.l.b16 %v617
        %v651 = vunpack.c.l.b16 %v618
        %v652 = vunpack.c.l.b16 %v619
        %v653 = vunpack.c.l.b16 %v620
        %v654 = vunpack.c.l.b16 %v621
        %v655 = vunpack.c.l.b16 %v622
        %v656 = vpack.c.b16 %v641, %v640
        %v657 = vpack.c.b16 %v643, %v642
        %v658 = vpack.c.b16 %v645, %v644
        %v659 = vpack.c.b16 %v647, %v646
        %v660 = vpack.c.b16 %v649, %v648
        %v661 = vpack.c.b16 %v651, %v650
        %v662 = vpack.c.b16 %v653, %v652
        %v663 = vpack.c.b16 %v655, %v654
        %672 = vmatpush.bf16.msra.mxu0 %v663
        %673 = vmatpush.bf16.msra.mxu0 %v662
        %674 = vmatpush.bf16.msra.mxu0 %v661
        %675 = vmatpush.bf16.msra.mxu0 %v660
        %676 = vmatpush.bf16.msra.mxu0 %v659
        %677 = vmatpush.bf16.msra.mxu0 %v658
        %678 = vmatpush.bf16.msra.mxu0 %v657
        %679 = vmatpush.bf16.msra.mxu0 %v656
        %680 = vmatmul.bf16.gmra.mxu0 %v606
        %v681 = vpop.f32.mrf.mxu0
        %v682 = vadd.f32 %v623, %v681
        %v683 = vpop.f32.mrf.mxu0
        %v684 = vadd.f32 %v623, %v683
        %685 = vdwg.mxu0
        %v686 = vmul.f32 %v682, 0.17677669
        %v687 = vmul.f32 %v684, 0.17677669
        %v688 = vpack.c.bf16 %v686, %v686
        %v689 = vpack.c.bf16 %v687, %v687
        %v690 = vld [vmem:[#allocation2] sm:$0xf]
        %v691 = vld [vmem:[#allocation2 + $0x4] sm:$0xf]
        %v692 = vld [vmem:[#allocation3] sm:$0xf]
        %v693 = vld [vmem:[#allocation3 + $0x4] sm:$0xf]
        %v694 = vld [vmem:[%s394] sm:$0x1]
        %vm695 = vcmp.gt.f32.partialorder %v694, 0.0
        %v696 = vsel %vm695, 0.0, -1e+10
        %v698 = vperm.slane %v696, 0
        %v702 = vunpack.c.l.b16 %v688
        %v703 = vunpack.c.l.b16 %v689
        %v704 = vpack.c.b16 %v703, %v702
        %v707 = vunpack.c.l.b16 %v690
        %v708 = vunpack.c.l.b16 %v691
        %v709 = vpack.c.b16 %v708, %v707
        %vm710 = vcmask 261120
        %v712 = vsel %vm710, %v704, 0
        %v715 = vsel %vm710, %v709, 0
        %717 = vmatpush.bf16.xpose.msra.mxu0 0
        %718 = vmatpush.bf16.xpose.msra.mxu0 0
        %719 = vmatpush.bf16.xpose.msra.mxu0 0
        %720 = vmatpush.bf16.xpose.msra.mxu0 0
        %721 = vmatpush.bf16.xpose.msra.mxu0 0
        %722 = vmatpush.bf16.xpose.msra.mxu0 0
        %723 = vmatpush.bf16.xpose.msra.mxu0 0
        %724 = vmatpush.bf16.xpose.msra.mxu0 %v715
        %725 = vmatmul.bf16.gmra.mxu0 %v712
        %v726 = vpop.f32.mrf.mxu0
        %v727 = vadd.f32 %v698, %v726
        %v728 = vpop.f32.mrf.mxu0
        %v729 = vadd.f32 %v698, %v728
        %730 = vdwg.mxu0
        %vm731 = vcmask 130048
        %v732 = vsel %vm731, %v727, -inf
        %733 = vmax.xlane.f32.xlu0 %v732
        %v734 = vpop.xlane.xlu0 %733
        %v735 = vsel %vm731, %v729, -inf
        %736 = vmax.xlane.f32.xlu0 %v735
        %v737 = vpop.xlane.xlu0 %736
        %v738 = vsub.f32 %v727, %v734
        %v739 = vsub.f32 %v729, %v737
        %v740 = vmul.f32 %v738, 1.442695
        %v741 = vpow.pop %v740
        %v742 = vmul.f32 %v739, 1.442695
        %v743 = vpow.pop %v742
        %v744 = vsel %vm731, %v741, 0.0
        %745 = vadd.xlane.f32.xlu0 %v744
        %v746 = vpop.xlane.xlu0 %745
        %v747 = vsel %vm731, %v743, 0.0
        %748 = vadd.xlane.f32.xlu0 %v747
        %v749 = vpop.xlane.xlu0 %748
        %v750 = vrcp.pop %v746
        %v751 = vrcp.pop %v749
        %v752 = vmul.f32 %v741, %v750
        %v753 = vmul.f32 %v743, %v751
        %v754 = vpack.c.bf16 %v753, %v752
        %v757 = vunpack.c.l.b16 %v692
        %v758 = vunpack.c.l.b16 %v693
        %v759 = vpack.c.b16 %v758, %v757
        %v762 = vsel %vm731, %v754, 0
        %764 = vmatpush.bf16.msra.mxu0 0
        %765 = vmatpush.bf16.msra.mxu0 0
        %766 = vmatpush.bf16.msra.mxu0 0
        %767 = vmatpush.bf16.msra.mxu0 0
        %768 = vmatpush.bf16.msra.mxu0 0
        %769 = vmatpush.bf16.msra.mxu0 0
        %770 = vmatpush.bf16.msra.mxu0 0
        %771 = vmatpush.bf16.msra.mxu0 %v759
        %772 = vmatmul.bf16.gmra.mxu0 %v762
        %v773 = vpop.f32.mrf.mxu0
        %v774 = vadd.f32 0.0, %v773
        %v775 = vpop.f32.mrf.mxu0
        %v776 = vadd.f32 0.0, %v775
        %777 = vdwg.mxu0
        %778 = vrot.lane.b32.xlu0 %v704, 96
        %v779 = vpop.permute.xlu0 %778
        %780 = vrot.lane.b32.xlu0 %v709, 96
        %v781 = vpop.permute.xlu0 %780
        %v783 = vsel %vm710, %v779, 0
        %v786 = vsel %vm710, %v781, 0
        %788 = vmatpush.bf16.xpose.msra.mxu0 0
        %789 = vmatpush.bf16.xpose.msra.mxu0 0
        %790 = vmatpush.bf16.xpose.msra.mxu0 0
        %791 = vmatpush.bf16.xpose.msra.mxu0 0
        %792 = vmatpush.bf16.xpose.msra.mxu0 0
        %793 = vmatpush.bf16.xpose.msra.mxu0 0
        %794 = vmatpush.bf16.xpose.msra.mxu0 0
        %795 = vmatpush.bf16.xpose.msra.mxu0 %v786
        %796 = vmatmul.bf16.gmra.mxu0 %v783
        %v797 = vpop.f32.mrf.mxu0
        %v798 = vadd.f32 %v698, %v797
        %v799 = vpop.f32.mrf.mxu0
        %v800 = vadd.f32 %v698, %v799
        %801 = vdwg.mxu0
        %v802 = vsel %vm731, %v798, -inf
        %803 = vmax.xlane.f32.xlu0 %v802
        %v804 = vpop.xlane.xlu0 %803
        %v805 = vsel %vm731, %v800, -inf
        %806 = vmax.xlane.f32.xlu0 %v805
        %v807 = vpop.xlane.xlu0 %806
        %v808 = vsub.f32 %v798, %v804
        %v809 = vsub.f32 %v800, %v807
        %v810 = vmul.f32 %v808, 1.442695
        %v811 = vpow.pop %v810
        %v812 = vmul.f32 %v809, 1.442695
        %v813 = vpow.pop %v812
        %v814 = vsel %vm731, %v811, 0.0
        %815 = vadd.xlane.f32.xlu0 %v814
        %v816 = vpop.xlane.xlu0 %815
        %v817 = vsel %vm731, %v813, 0.0
        %818 = vadd.xlane.f32.xlu0 %v817
        %v819 = vpop.xlane.xlu0 %818
        %v820 = vrcp.pop %v816
        %v821 = vrcp.pop %v819
        %v822 = vmul.f32 %v811, %v820
        %v823 = vmul.f32 %v813, %v821
        %v824 = vpack.c.bf16 %v823, %v822
        %825 = vrot.lane.b32.xlu0 %v759, 96
        %v826 = vpop.permute.xlu0 %825
        %v829 = vsel %vm731, %v824, 0
        %831 = vmatpush.bf16.msra.mxu0 0
        %832 = vmatpush.bf16.msra.mxu0 0
        %833 = vmatpush.bf16.msra.mxu0 0
        %834 = vmatpush.bf16.msra.mxu0 0
        %835 = vmatpush.bf16.msra.mxu0 0
        %836 = vmatpush.bf16.msra.mxu0 0
        %837 = vmatpush.bf16.msra.mxu0 0
        %838 = vmatpush.bf16.msra.mxu0 %v826
        %839 = vmatmul.bf16.gmra.mxu0 %v829
        %v840 = vpop.f32.mrf.mxu0
        %v841 = vadd.f32 0.0, %v840
        %v842 = vpop.f32.mrf.mxu0
        %v843 = vadd.f32 0.0, %v842
        %844 = vdwg.mxu0
        %845 = vrot.lane.b32.xlu0 %v704, 64
        %v846 = vpop.permute.xlu0 %845
        %847 = vrot.lane.b32.xlu0 %v709, 64
        %v848 = vpop.permute.xlu0 %847
        %v850 = vsel %vm710, %v846, 0
        %v853 = vsel %vm710, %v848, 0
        %855 = vmatpush.bf16.xpose.msra.mxu0 0
        %856 = vmatpush.bf16.xpose.msra.mxu0 0
        %857 = vmatpush.bf16.xpose.msra.mxu0 0
        %858 = vmatpush.bf16.xpose.msra.mxu0 0
        %859 = vmatpush.bf16.xpose.msra.mxu0 0
        %860 = vmatpush.bf16.xpose.msra.mxu0 0
        %861 = vmatpush.bf16.xpose.msra.mxu0 0
        %862 = vmatpush.bf16.xpose.msra.mxu0 %v853
        %863 = vmatmul.bf16.gmra.mxu0 %v850
        %v864 = vpop.f32.mrf.mxu0
        %v865 = vadd.f32 %v698, %v864
        %v866 = vpop.f32.mrf.mxu0
        %v867 = vadd.f32 %v698, %v866
        %868 = vdwg.mxu0
        %v869 = vsel %vm731, %v865, -inf
        %870 = vmax.xlane.f32.xlu0 %v869
        %v871 = vpop.xlane.xlu0 %870
        %v872 = vsel %vm731, %v867, -inf
        %873 = vmax.xlane.f32.xlu0 %v872
        %v874 = vpop.xlane.xlu0 %873
        %v875 = vsub.f32 %v865, %v871
        %v876 = vsub.f32 %v867, %v874
        %v877 = vmul.f32 %v875, 1.442695
        %v878 = vpow.pop %v877
        %v879 = vmul.f32 %v876, 1.442695
        %v880 = vpow.pop %v879
        %v881 = vsel %vm731, %v878, 0.0
        %882 = vadd.xlane.f32.xlu0 %v881
        %v883 = vpop.xlane.xlu0 %882
        %v884 = vsel %vm731, %v880, 0.0
        %885 = vadd.xlane.f32.xlu0 %v884
        %v886 = vpop.xlane.xlu0 %885
        %v887 = vrcp.pop %v883
        %v888 = vrcp.pop %v886
        %v889 = vmul.f32 %v878, %v887
        %v890 = vmul.f32 %v880, %v888
        %v891 = vpack.c.bf16 %v890, %v889
        %892 = vrot.lane.b32.xlu0 %v759, 64
        %v893 = vpop.permute.xlu0 %892
        %v896 = vsel %vm731, %v891, 0
        %898 = vmatpush.bf16.msra.mxu0 0
        %899 = vmatpush.bf16.msra.mxu0 0
        %900 = vmatpush.bf16.msra.mxu0 0
        %901 = vmatpush.bf16.msra.mxu0 0
        %902 = vmatpush.bf16.msra.mxu0 0
        %903 = vmatpush.bf16.msra.mxu0 0
        %904 = vmatpush.bf16.msra.mxu0 0
        %905 = vmatpush.bf16.msra.mxu0 %v893
        %906 = vmatmul.bf16.gmra.mxu0 %v896
        %v907 = vpop.f32.mrf.mxu0
        %v908 = vadd.f32 0.0, %v907
        %v909 = vpop.f32.mrf.mxu0
        %v910 = vadd.f32 0.0, %v909
        %911 = vdwg.mxu0
        %912 = vrot.lane.b32.xlu0 %v704, 32
        %v913 = vpop.permute.xlu0 %912
        %914 = vrot.lane.b32.xlu0 %v709, 32
        %v915 = vpop.permute.xlu0 %914
        %v917 = vsel %vm710, %v913, 0
        %v920 = vsel %vm710, %v915, 0
        %922 = vmatpush.bf16.xpose.msra.mxu0 0
        %923 = vmatpush.bf16.xpose.msra.mxu0 0
        %924 = vmatpush.bf16.xpose.msra.mxu0 0
        %925 = vmatpush.bf16.xpose.msra.mxu0 0
        %926 = vmatpush.bf16.xpose.msra.mxu0 0
        %927 = vmatpush.bf16.xpose.msra.mxu0 0
        %928 = vmatpush.bf16.xpose.msra.mxu0 0
        %929 = vmatpush.bf16.xpose.msra.mxu0 %v920
        %930 = vmatmul.bf16.gmra.mxu0 %v917
        %v931 = vpop.f32.mrf.mxu0
        %v932 = vadd.f32 %v698, %v931
        %v933 = vpop.f32.mrf.mxu0
        %v934 = vadd.f32 %v698, %v933
        %935 = vdwg.mxu0
        %v936 = vsel %vm731, %v932, -inf
        %937 = vmax.xlane.f32.xlu0 %v936
        %v938 = vpop.xlane.xlu0 %937
        %v939 = vsel %vm731, %v934, -inf
        %940 = vmax.xlane.f32.xlu0 %v939
        %v941 = vpop.xlane.xlu0 %940
        %v942 = vsub.f32 %v932, %v938
        %v943 = vsub.f32 %v934, %v941
        %v944 = vmul.f32 %v942, 1.442695
        %v945 = vpow.pop %v944
        %v946 = vmul.f32 %v943, 1.442695
        %v947 = vpow.pop %v946
        %v948 = vsel %vm731, %v945, 0.0
        %949 = vadd.xlane.f32.xlu0 %v948
        %v950 = vpop.xlane.xlu0 %949
        %v951 = vsel %vm731, %v947, 0.0
        %952 = vadd.xlane.f32.xlu0 %v951
        %v953 = vpop.xlane.xlu0 %952
        %v954 = vrcp.pop %v950
        %v955 = vrcp.pop %v953
        %v956 = vmul.f32 %v945, %v954
        %v957 = vmul.f32 %v947, %v955
        %v958 = vpack.c.bf16 %v957, %v956
        %959 = vrot.lane.b32.xlu0 %v759, 32
        %v960 = vpop.permute.xlu0 %959
        %v963 = vsel %vm731, %v958, 0
        %965 = vmatpush.bf16.msra.mxu0 0
        %966 = vmatpush.bf16.msra.mxu0 0
        %967 = vmatpush.bf16.msra.mxu0 0
        %968 = vmatpush.bf16.msra.mxu0 0
        %969 = vmatpush.bf16.msra.mxu0 0
        %970 = vmatpush.bf16.msra.mxu0 0
        %971 = vmatpush.bf16.msra.mxu0 0
        %972 = vmatpush.bf16.msra.mxu0 %v960
        %973 = vmatmul.bf16.gmra.mxu0 %v963
        %v974 = vpop.f32.mrf.mxu0
        %v975 = vadd.f32 0.0, %v974
        %v976 = vpop.f32.mrf.mxu0
        %v977 = vadd.f32 0.0, %v976
        %978 = vdwg.mxu0
        %981 = vrot.lane.b32.xlu0 %v841, 32
        %v982 = vpop.permute.xlu0 %981
        %983 = vrot.lane.b32.xlu0 %v843, 32
        %v984 = vpop.permute.xlu0 %983
        %989 = vrot.lane.b32.xlu0 %v908, 64
        %v990 = vpop.permute.xlu0 %989
        %991 = vrot.lane.b32.xlu0 %v910, 64
        %v992 = vpop.permute.xlu0 %991
        %997 = vrot.lane.b32.xlu0 %v975, 96
        %v998 = vpop.permute.xlu0 %997
        %999 = vrot.lane.b32.xlu0 %v977, 96
        %v1000 = vpop.permute.xlu0 %999
        %v1003 = vsel %vm710, %v774, %v982
        %v1004 = vsel %vm710, %v776, %v984
        %vm1005 = vcmask 523264
        %v1006 = vsel %vm1005, %v1003, %v990
        %v1007 = vsel %vm1005, %v1004, %v992
        %vm1008 = vcmask 785408
        %v1009 = vsel %vm1008, %v1006, %v998
        %v1010 = vsel %vm1008, %v1007, %v1000
        %v1011 = vpack.c.bf16 %v1010, %v1009
        %v1012 = vld [vmem:[#allocation13] sm:$0xf]
        %v1013 = vld [vmem:[#allocation13 + $0x4] sm:$0xf]
        %v1014 = vld [vmem:[#allocation13 + $0x8] sm:$0xf]
        %v1015 = vld [vmem:[#allocation13 + $0xc] sm:$0xf]
        %v1016 = vld [vmem:[#allocation13 + $0x10] sm:$0xf]
        %v1017 = vld [vmem:[#allocation13 + $0x14] sm:$0xf]
        %v1018 = vld [vmem:[#allocation13 + $0x18] sm:$0xf]
        %v1019 = vld [vmem:[#allocation13 + $0x1c] sm:$0xf]
        %v1020 = vld [vmem:[#allocation13 + $0x20] sm:$0xf]
        %v1021 = vld [vmem:[#allocation13 + $0x24] sm:$0xf]
        %v1022 = vld [vmem:[#allocation13 + $0x28] sm:$0xf]
        %v1023 = vld [vmem:[#allocation13 + $0x2c] sm:$0xf]
        %v1024 = vld [vmem:[#allocation13 + $0x30] sm:$0xf]
        %v1025 = vld [vmem:[#allocation13 + $0x34] sm:$0xf]
        %v1026 = vld [vmem:[#allocation13 + $0x38] sm:$0xf]
        %v1027 = vld [vmem:[#allocation13 + $0x3c] sm:$0xf]
        %v1028 = vperm.slane %v458, 3
        %v1045 = vunpack.c.l.b16 %v1012
        %v1046 = vunpack.c.l.b16 %v1013
        %v1047 = vunpack.c.l.b16 %v1014
        %v1048 = vunpack.c.l.b16 %v1015
        %v1049 = vunpack.c.l.b16 %v1016
        %v1050 = vunpack.c.l.b16 %v1017
        %v1051 = vunpack.c.l.b16 %v1018
        %v1052 = vunpack.c.l.b16 %v1019
        %v1053 = vunpack.c.l.b16 %v1020
        %v1054 = vunpack.c.l.b16 %v1021
        %v1055 = vunpack.c.l.b16 %v1022
        %v1056 = vunpack.c.l.b16 %v1023
        %v1057 = vunpack.c.l.b16 %v1024
        %v1058 = vunpack.c.l.b16 %v1025
        %v1059 = vunpack.c.l.b16 %v1026
        %v1060 = vunpack.c.l.b16 %v1027
        %v1061 = vpack.c.b16 %v1046, %v1045
        %v1062 = vpack.c.b16 %v1048, %v1047
        %v1063 = vpack.c.b16 %v1050, %v1049
        %v1064 = vpack.c.b16 %v1052, %v1051
        %v1065 = vpack.c.b16 %v1054, %v1053
        %v1066 = vpack.c.b16 %v1056, %v1055
        %v1067 = vpack.c.b16 %v1058, %v1057
        %v1068 = vpack.c.b16 %v1060, %v1059
        %1077 = vmatpush.bf16.msra.mxu0 %v1068
        %1078 = vmatpush.bf16.msra.mxu0 %v1067
        %1079 = vmatpush.bf16.msra.mxu0 %v1066
        %1080 = vmatpush.bf16.msra.mxu0 %v1065
        %1081 = vmatpush.bf16.msra.mxu0 %v1064
        %1082 = vmatpush.bf16.msra.mxu0 %v1063
        %1083 = vmatpush.bf16.msra.mxu0 %v1062
        %1084 = vmatpush.bf16.msra.mxu0 %v1061
        %1085 = vmatmul.bf16.gmra.mxu0 %v1011
        %v1086 = vpop.f32.mrf.mxu0
        %v1087 = vadd.f32 %v1028, %v1086
        %v1088 = vpop.f32.mrf.mxu0
        %v1089 = vadd.f32 %v1028, %v1088
        %1090 = vdwg.mxu0
        %v1091 = vadd.f32 %v604, %v1087
        %v1092 = vadd.f32 %v605, %v1089
        %1093 = vadd.xlane.f32.xlu0 %v1091
        %v1094 = vpop.xlane.xlu0 %1093
        %1095 = vadd.xlane.f32.xlu0 %v1092
        %v1096 = vpop.xlane.xlu0 %1095
        %v1097 = vrcp.pop 128.0
        %v1098 = vmul.f32 128.0, %v1097
        %v1099 = vsub.f32 1.0, %v1098
        %v1100 = vmul.f32 %v1097, %v1099
        %v1101 = vadd.f32 %v1097, %v1100
        %vm1102 = vweird.f32 %v1097
        %v1103 = vsel %vm1102, %v1097, %v1101
        %v1104 = vmul.f32 %v1094, %v1103
        %v1105 = vmul.f32 %v1096, %v1103
        %v1106 = vsub.f32 %v1091, %v1104
        %v1107 = vsub.f32 %v1092, %v1105
        %v1108 = vmul.f32 %v1106, %v1106
        %v1109 = vmul.f32 %v1107, %v1107
        %1110 = vadd.xlane.f32.xlu0 %v1108
        %v1111 = vpop.xlane.xlu0 %1110
        %1112 = vadd.xlane.f32.xlu0 %v1109
        %v1113 = vpop.xlane.xlu0 %1112
        %v1114 = vmul.f32 %v1111, %v1103
        %v1115 = vmul.f32 %v1113, %v1103
        %v1116 = vadd.f32 %v1114, 1e-05
        %v1117 = vadd.f32 %v1115, 1e-05
        %v1118 = vrsqrt.pop %v1116
        %v1119 = vmul.f32 %v1118, %v1116
        %v1120 = vmul.f32 %v1119, %v1118
        %v1121 = vmul.f32 0.5, %v1120
        %v1122 = vsub.f32 1.5, %v1121
        %v1123 = vmul.f32 %v1118, %v1122
        %vm1124 = vweird.f32 %v1116
        %vm1125 = vweird.f32 %v1118
        %vm1126 = vmor %vm1124, %vm1125
        %v1127 = vsel %vm1126, %v1118, %v1123
        %v1128 = vrsqrt.pop %v1117
        %v1129 = vmul.f32 %v1128, %v1117
        %v1130 = vmul.f32 %v1129, %v1128
        %v1131 = vmul.f32 0.5, %v1130
        %v1132 = vsub.f32 1.5, %v1131
        %v1133 = vmul.f32 %v1128, %v1132
        %vm1134 = vweird.f32 %v1117
        %vm1135 = vweird.f32 %v1128
        %vm1136 = vmor %vm1134, %vm1135
        %v1137 = vsel %vm1136, %v1128, %v1133
        %v1138 = vmul.f32 %v1106, %v1127
        %v1139 = vmul.f32 %v1107, %v1137
        %v1140 = vperm.slane %v458, 4
        %v1141 = vmul.f32 %v1138, %v1140
        %v1142 = vmul.f32 %v1139, %v1140
        %v1143 = vperm.slane %v458, 5
        %v1144 = vadd.f32 %v1141, %v1143
        %v1145 = vadd.f32 %v1142, %v1143
        %1146 = vst [vmem:[%s454] sm:$0xff] %v1144
        %1147 = vst [vmem:[%s454 + $0x8] sm:$0xff] %v1145
        %s1148 = sand.u32 %s215, 1
        %s1149 = scalar_lea.sflag [#allocation6], %s1148
        %s1150 = sand.u32 %s215, 1
        %s1151 = smul.addr %s1150, 16
        %s1152 = scalar_lea.vmem [#allocation16], %s1151
        // Predicated region
        $region81: #{tpu_custom_call.1} parent=47 // pred_check
          %p1153 = pneg %p225
        $region82: #{tpu_custom_call.1} parent=47 // pred_check_branch
          %1155 = sbr.rel (%p1153) target = $region84
        $region83: #{tpu_custom_call.1} parent=47 // pred_region
          %s1156 = smul.u32 2, %s34
          %1158 = vsyncadd %s1149, 0
          %s1159 = smul.addr %s33, 2
          %s1160 = sadd.s32 %s1156, %s1159
          %s1161 = smul.addr %s1160, 8
          %s1162 = scalar_lea.hbm %s7, %s1161
          %s1163 = sshll.u32 %s1152, 4
          %s1164 = int_to_ptr.vmem [resolvable:$true] %s1163
          %s1165 = sshll.u32 %s1162, 4
          %s1166 = int_to_ptr.hbm [resolvable:$true] %s1165
          %1171 = dma.vmem_to_hbm [thread:$0]  %s1164, 256, %s1166, %s1149, 128, 128, 8
        $region84: #{tpu_custom_call.1} parent=47 // pred_fallthru
          _
      $region48: #{tpu_custom_call.1} parent=5 // pred_fallthru
        _
      %p1172 = scmp.le.s32.totalorder 2, %s24
      // Predicated region
      $region85: #{tpu_custom_call.1} parent=5 // pred_check
        %p1173 = pneg %p1172
      $region86: #{tpu_custom_call.1} parent=5 // pred_check_branch
        %1175 = sbr.rel (%p1173) target = $region88
      $region87: #{tpu_custom_call.1} parent=5 // pred_region
        %s1176 = ssub.s32 %s24, 2
        // Predicated region
        $region89: #{tpu_custom_call.1} parent=87 // pred_check
          %p1177 = pneg %p231
        $region90: #{tpu_custom_call.1} parent=87 // pred_check_branch
          %1179 = sbr.rel (%p1177) target = $region92
        $region91: #{tpu_custom_call.1} parent=87 // pred_region
          %s1180 = sand.u32 %s216, 1
          %s1181 = scalar_lea.sflag [#allocation6], %s1180
          %s1182 = sand.u32 %s216, 1
          %s1183 = smul.addr %s1182, 16
          %s1184 = scalar_lea.vmem [#allocation16], %s1183
          %1186 = dma.done %s1181, 256
        $region92: #{tpu_custom_call.1} parent=87 // pred_fallthru
          _
      $region88: #{tpu_custom_call.1} parent=5 // pred_fallthru
        _
    $region6: #{tpu_custom_call.1} parent=1 // loop_footer
      %s28 = sadd.s32 1, %s24
    $region7: #{tpu_custom_call.1} parent=1 // loop_footer_branch
      %23 = sbr.rel target = $region3
    $region8: #{tpu_custom_call.1} parent=1 // loop_exit
      _
    %1187 = vsyncpa [#allocation5], 1
    %s1188 = scalar_lea.sflag [#allocation5], 1
    %1189 = vsyncpa %s1188, 1
    %1190 = vsyncpa [#allocation8], 1
    %s1191 = scalar_lea.sflag [#allocation8], 1
    %1192 = vsyncpa %s1191, 1
    %1193 = vsyncpa [#allocation11], 1
    %1194 = vsyncpa [#allocation14], 1
    %1195 = vsyncpa [#allocation6], 1
    %s1196 = scalar_lea.sflag [#allocation6], 1
    %1197 = vsyncpa %s1196, 1

</llo_original>
